<compile_context>
chip_gen: v7x
topology: tpu7x:2x2x1
jax: 0.10.0
libtpu: 0.0.40
codegen_flags: <defaults>
</compile_context>

<pallas_src>
import functools

import jax
import jax.numpy as jnp
from jax.experimental import pallas as pl
from jax.experimental.pallas import tpu as pltpu


def _round_up(a: int, b: int) -> int:
    return (a + b - 1) // b * b


def _vmem_budget_bytes() -> int:
    """~75% of physical VMEM as the scoped limit; conservative fallback if unknown."""
    try:
        cap = int(pltpu.get_tpu_info().vmem_capacity_bytes)
    except Exception:
        cap = 64 << 20
    return max(32 << 20, cap * 3 // 4)


def _pick_tile_k(n_pad: int, tile_m: int, adj_budget_bytes: int, col_tile=None) -> int:
    """Largest multiple of 128 dividing n_pad s.t. a double-buffered bf16 (tile_m, tile_k)
    adjacency block fits the budget (optionally capped by col_tile)."""
    max_elems = max(128, adj_budget_bytes // (2 * 2 * tile_m))  # 2 bufs * 2 B/elem
    tile_k = max(128, min(n_pad, (max_elems // 128) * 128))
    if col_tile is not None:
        tile_k = max(128, min(tile_k, _round_up(col_tile, 128)))
    while n_pad % tile_k:
        tile_k -= 128
    return tile_k


# --------------------------------------------------------------------------- kernels
def _project_kernel(x_ref, w_ref, b_ref, s_ref):
    """s = x @ W + b for one row tile (W, b VMEM-resident); emitted in bf16."""
    s = jnp.dot(x_ref[...], w_ref[...], preferred_element_type=jnp.float32) + b_ref[...]
    s_ref[...] = s.astype(s_ref.dtype)


def _agg1_proj2_kernel(adj_ref, s1_ref, w2_ref, b2_ref, s2_ref, acc_ref, *, tile_k):
    """Accumulate adj_rowblock @ s1 (bf16 x bf16 -> f32); at the last K step apply relu
    and fuse the layer-2 projection: s2 = relu(acc) @ W2 + b2 (bf16 out). h1 never
    leaves VMEM."""
    k = pl.program_id(1)

    @pl.when(k == 0)
    def _():
        acc_ref[...] = jnp.zeros_like(acc_ref)

    start = pl.multiple_of(k * tile_k, 128)
    acc_ref[...] += jnp.dot(adj_ref[...], s1_ref[pl.ds(start, tile_k), :],
                            preferred_element_type=jnp.float32)

    @pl.when(k == pl.num_programs(1) - 1)
    def _():
        h1 = jnp.maximum(acc_ref[...], 0.0)
        s2 = jnp.dot(h1, w2_ref[...], preferred_element_type=jnp.float32) + b2_ref[...]
        s2_ref[...] = s2.astype(s2_ref.dtype)


def _agg2_head_kernel(adj_ref, s2_ref, w3_ref, b3_ref, out_ref, acc_ref, *, tile_k):
    """Accumulate adj_rowblock @ s2; at the last K step apply relu and the trust head
    (VPU multiply + lane reduction, no width-1 MXU matmul)."""
    k = pl.program_id(1)

    @pl.when(k == 0)
    def _():
        acc_ref[...] = jnp.zeros_like(acc_ref)

    start = pl.multiple_of(k * tile_k, 128)
    acc_ref[...] += jnp.dot(adj_ref[...], s2_ref[pl.ds(start, tile_k), :],
                            preferred_element_type=jnp.float32)

    @pl.when(k == pl.num_programs(1) - 1)
    def _():
        h2 = jnp.maximum(acc_ref[...], 0.0)
        logit = jnp.sum(h2 * w3_ref[...], axis=-1, keepdims=True) + b3_ref[...]
        out_ref[...] = jax.nn.sigmoid(logit)


def _fused_resident_kernel(x_ref, adj_ref, w1_ref, b1_ref, w2_ref, b2_ref,
                           w3_ref, b3_ref, out_ref):
    """Small-graph fast path: bf16 adjacency resident in VMEM, read from HBM once,
    reused for both aggregations; all matmuls accumulate in f32."""
    adj = adj_ref[...]  # bf16
    s1 = (jnp.dot(x_ref[...], w1_ref[...], preferred_element_type=jnp.float32)
          + b1_ref[...]).astype(jnp.bfloat16)
    h1 = jnp.maximum(jnp.dot(adj, s1, preferred_element_type=jnp.float32), 0.0)
    s2 = (jnp.dot(h1, w2_ref[...], preferred_element_type=jnp.float32)
          + b2_ref[...]).astype(jnp.bfloat16)
    h2 = jnp.maximum(jnp.dot(adj, s2, preferred_element_type=jnp.float32), 0.0)
    logit = jnp.sum(h2 * w3_ref[...], axis=-1, keepdims=True) + b3_ref[...]
    out_ref[...] = jax.nn.sigmoid(logit)


# --------------------------------------------------------------------------- wrapper
def hierarchical_trust_gnn(x, adj, params, *, row_tile=512, col_tile=None,
                           force_streamed=False):
    """x: [N, F] f32, adj: [N, N] (f32 or bf16), params: dict. Returns [N] f32 trust."""
    n, f = x.shape
    assert adj.shape == (n, n)
    assert row_tile % 128 == 0 and row_tile > 0

    w1, b1 = params["w1"], params["b1"]
    w2, b2 = params["w2"], params["b2"]
    w3, b3 = params["w3"], params["b3"]
    hidden = w1.shape[1]
    embed = w2.shape[1]

    budget = _vmem_budget_bytes()

    # Dominant operand streamed / held in bf16 (halves HBM traffic on adj).
    adj = adj.astype(jnp.bfloat16)
    x = x.astype(jnp.float32)

    # Pad node count: lane dim multiple of 128, row dim multiple of the row tile.
    # Zero pad rows/cols cannot leak into real outputs; pad rows are sliced off.
    n_lane = _round_up(n, 128)
    tile_m = min(row_tile, n_lane)
    n_pad = _round_up(n_lane, tile_m)
    if n_pad != n:
        x = jnp.pad(x, ((0, n_pad - n), (0, 0)))
        adj = jnp.pad(adj, ((0, n_pad - n), (0, n_pad - n)))

    # ---------------- fast path: adjacency fits VMEM -> read adj from HBM once
    resident_bytes = 2 * n_pad * n_pad + 4 * n_pad * (f + 2 * hidden + 2 * embed + 4)
    if resident_bytes <= budget // 2 and not force_streamed:
        full = lambda arr: pl.BlockSpec(arr.shape, lambda i: (0, 0))
        trust = pl.pallas_call(
            _fused_resident_kernel,
            out_shape=jax.ShapeDtypeStruct((n_pad, 1), jnp.float32),
            grid=(1,),
            in_specs=[full(x), full(adj), full(w1), full(b1), full(w2), full(b2),
                      full(w3), full(b3)],
            out_specs=pl.BlockSpec((n_pad, 1), lambda i: (0, 0)),
            compiler_params=pltpu.CompilerParams(
                dimension_semantics=("arbitrary",), vmem_limit_bytes=budget),
        )(x, adj, w1, b1, w2, b2, w3, b3)
        return trust.reshape(-1)[:n]

    # ---------------- streamed path: (row x column)-tiled adjacency, bf16 operands
    tile_k = _pick_tile_k(n_pad, tile_m, budget // 2, col_tile)
    grid2 = (n_pad // tile_m, n_pad // tile_k)
    mc1 = pltpu.CompilerParams(dimension_semantics=("parallel",),
                               vmem_limit_bytes=budget)
    mc2 = pltpu.CompilerParams(dimension_semantics=("parallel", "arbitrary"),
                               vmem_limit_bytes=budget)
    resident2 = lambda arr: pl.BlockSpec(arr.shape, lambda i, k: (0, 0))

    # s1 = x @ W1 + b1  (row-tiled, emitted bf16)
    s1 = pl.pallas_call(
        _project_kernel,
        out_shape=jax.ShapeDtypeStruct((n_pad, hidden), jnp.bfloat16),
        grid=(n_pad // tile_m,),
        in_specs=[pl.BlockSpec((tile_m, f), lambda i: (i, 0)),
                  pl.BlockSpec(w1.shape, lambda i: (0, 0)),
                  pl.BlockSpec(b1.shape, lambda i: (0, 0))],
        out_specs=pl.BlockSpec((tile_m, hidden), lambda i: (i, 0)),
        compiler_params=mc1,
    )(x, w1, b1)

    # s2 = relu(adj @ s1) @ W2 + b2  (adj streamed, h1 never materialized in HBM)
    s2 = pl.pallas_call(
        functools.partial(_agg1_proj2_kernel, tile_k=tile_k),
        out_shape=jax.ShapeDtypeStruct((n_pad, embed), jnp.bfloat16),
        grid=grid2,
        in_specs=[pl.BlockSpec((tile_m, tile_k), lambda i, k: (i, k)),
                  resident2(s1), resident2(w2), resident2(b2)],
        out_specs=pl.BlockSpec((tile_m, embed), lambda i, k: (i, 0)),
        scratch_shapes=[pltpu.VMEM((tile_m, hidden), jnp.float32)],
        compiler_params=mc2,
    )(adj, s1, w2, b2)

    # trust = sigmoid(sum(relu(adj @ s2) * w3, -1) + b3)
    trust = pl.pallas_call(
        functools.partial(_agg2_head_kernel, tile_k=tile_k),
        out_shape=jax.ShapeDtypeStruct((n_pad, 1), jnp.float32),
        grid=grid2,
        in_specs=[pl.BlockSpec((tile_m, tile_k), lambda i, k: (i, k)),
                  resident2(s2), resident2(w3), resident2(b3)],
        out_specs=pl.BlockSpec((tile_m, 1), lambda i, k: (i, 0)),
        scratch_shapes=[pltpu.VMEM((tile_m, embed), jnp.float32)],
        compiler_params=mc2,
    )(adj, s2, w3, b3)

    return trust.reshape(-1)[:n]


def init_params(key, num_features, embedding_dim=32, hidden_dim=16):
    """Deterministic synthetic init (PyTorch-Linear-style uniform ranges)."""
    ks = jax.random.split(key, 6)

    def linear(kw, kb, fan_in, fan_out):
        bound = 1.0 / float(fan_in) ** 0.5
        w = jax.random.uniform(kw, (fan_in, fan_out), jnp.float32, -bound, bound)
        b = jax.random.uniform(kb, (1, fan_out), jnp.float32, -bound, bound)
        return w, b

    w1, b1 = linear(ks[0], ks[1], num_features, hidden_dim)
    w2, b2 = linear(ks[2], ks[3], hidden_dim, embedding_dim)
    w3, b3 = linear(ks[4], ks[5], embedding_dim, 1)
    return {
        "w1": w1, "b1": b1,
        "w2": w2, "b2": b2,
        "w3": w3.reshape(1, embedding_dim), "b3": b3.reshape(1, 1),
    }


if __name__ == "__main__":
    num_nodes = 200     # exercises padding (200 -> 256)
    num_features = 10
    embedding_dim = 32
    hidden_dim = 16

    key = jax.random.PRNGKey(0)
    k_x, k_adj, k_p = jax.random.split(key, 3)

    x = jax.random.normal(k_x, (num_nodes, num_features), jnp.float32)

    # symmetric row-normalized adjacency with self-loops
    a = (jax.random.uniform(k_adj, (num_nodes, num_nodes)) > 0.7).astype(jnp.float32)
    adj = jnp.minimum(a + a.T + jnp.eye(num_nodes, dtype=jnp.float32), 1.0)
    adj = adj / jnp.sum(adj, axis=1, keepdims=True)
    adj_bf16 = adj.astype(jnp.bfloat16)

    params = init_params(k_p, num_features, embedding_dim, hidden_dim)

    # 1) fast path: adjacency resident, single fused kernel, adj read from HBM once
    trust_fast = jax.block_until_ready(hierarchical_trust_gnn(x, adj_bf16, params))
    # 2) streamed path forced with small tiles, to exercise the row x K grid + accumulator
    trust_stream = jax.block_until_ready(
        hierarchical_trust_gnn(x, adj_bf16, params, row_tile=128, col_tile=128,
                               force_streamed=True))

    # Reference mirrors the kernel numerics: bf16 adjacency, bf16-rounded s1/s2, f32 accum.
    hp = jax.lax.Precision.HIGHEST
    adj_f32 = adj_bf16.astype(jnp.float32)
    s1 = (jnp.dot(x, params["w1"], precision=hp) + params["b1"]
          ).astype(jnp.bfloat16).astype(jnp.float32)
    h1 = jnp.maximum(jnp.dot(adj_f32, s1, precision=hp), 0.0)
    s2 = (jnp.dot(h1, params["w2"], precision=hp) + params["b2"]
          ).astype(jnp.bfloat16).astype(jnp.float32)
    h2 = jnp.maximum(jnp.dot(adj_f32, s2, precision=hp), 0.0)
    ref = jax.nn.sigmoid(jnp.sum(h2 * params["w3"], axis=-1) + params["b3"][0, 0])

    for trust in (trust_fast, trust_stream):
        assert trust.shape == (num_nodes,)
        err = float(jnp.max(jnp.abs(trust - ref)))
        assert jnp.allclose(trust, ref, atol=5e-3, rtol=5e-3), err

    print("KERNEL_OK")
</pallas_src>

<mosaic_0001>
module attributes {stable_mosaic.version = 11 : i64} {
  func.func @_fused_resident_kernel(%arg0: i32, %arg1: memref<256x10xf32, #tpu.memory_space<vmem>>, %arg2: memref<256x256xbf16, #tpu.memory_space<vmem>>, %arg3: memref<10x16xf32, #tpu.memory_space<vmem>>, %arg4: memref<1x16xf32, #tpu.memory_space<vmem>>, %arg5: memref<16x32xf32, #tpu.memory_space<vmem>>, %arg6: memref<1x32xf32, #tpu.memory_space<vmem>>, %arg7: memref<1x32xf32, #tpu.memory_space<vmem>>, %arg8: memref<1x1xf32, #tpu.memory_space<vmem>>, %arg9: memref<256x1xf32, #tpu.memory_space<vmem>>) attributes {dimension_semantics = [#tpu.dimension_semantics<arbitrary>], iteration_bounds = array<i64: 1>, scalar_prefetch = 0 : i64, scratch_operands = 0 : i64, tpu.core_type = #tpu.core_type<tc>, window_params = [{pipeline_mode = #tpu.pipeline_mode<synchronous>, transform_indices = @transform_0, window_bounds = array<i64: 256, 10>}, {pipeline_mode = #tpu.pipeline_mode<synchronous>, transform_indices = @transform_1, window_bounds = array<i64: 256, 256>}, {pipeline_mode = #tpu.pipeline_mode<synchronous>, transform_indices = @transform_2, window_bounds = array<i64: 10, 16>}, {pipeline_mode = #tpu.pipeline_mode<synchronous>, transform_indices = @transform_3, window_bounds = array<i64: 1, 16>}, {pipeline_mode = #tpu.pipeline_mode<synchronous>, transform_indices = @transform_4, window_bounds = array<i64: 16, 32>}, {pipeline_mode = #tpu.pipeline_mode<synchronous>, transform_indices = @transform_5, window_bounds = array<i64: 1, 32>}, {pipeline_mode = #tpu.pipeline_mode<synchronous>, transform_indices = @transform_6, window_bounds = array<i64: 1, 32>}, {pipeline_mode = #tpu.pipeline_mode<synchronous>, transform_indices = @transform_7, window_bounds = array<i64: 1, 1>}, {pipeline_mode = #tpu.pipeline_mode<synchronous>, transform_indices = @transform_8, window_bounds = array<i64: 256, 1>}]} {
    %c0 = arith.constant 0 : index
    %c0_0 = arith.constant 0 : index
    %0 = vector.load %arg2[%c0, %c0_0] : memref<256x256xbf16, #tpu.memory_space<vmem>>, vector<256x256xbf16>
    %c0_1 = arith.constant 0 : index
    %c0_2 = arith.constant 0 : index
    %1 = vector.load %arg1[%c0_1, %c0_2] : memref<256x10xf32, #tpu.memory_space<vmem>>, vector<256x10xf32>
    %c0_3 = arith.constant 0 : index
    %c0_4 = arith.constant 0 : index
    %2 = vector.load %arg3[%c0_3, %c0_4] : memref<10x16xf32, #tpu.memory_space<vmem>>, vector<10x16xf32>
    %cst = arith.constant dense<0.000000e+00> : vector<256x16xf32>
    %3 = tpu.matmul %1, %2, %cst {dimension_numbers = #tpu.dot_dimension_numbers<[1], [0], [0], [1], [0, 0, 1, 1], [], []>} : vector<256x10xf32>, vector<10x16xf32>, vector<256x16xf32> -> vector<256x16xf32>
    %c0_5 = arith.constant 0 : index
    %c0_6 = arith.constant 0 : index
    %4 = vector.load %arg4[%c0_5, %c0_6] : memref<1x16xf32, #tpu.memory_space<vmem>>, vector<1x16xf32>
    %5 = vector.broadcast %4 : vector<1x16xf32> to vector<256x16xf32>
    %6 = arith.addf %3, %5 : vector<256x16xf32>
    %7 = arith.truncf %6 : vector<256x16xf32> to vector<256x16xbf16>
    %cst_7 = arith.constant dense<0.000000e+00> : vector<256x16xf32>
    %8 = tpu.matmul %0, %7, %cst_7 {dimension_numbers = #tpu.dot_dimension_numbers<[1], [0], [0], [1], [0, 0, 1, 1], [], []>} : vector<256x256xbf16>, vector<256x16xbf16>, vector<256x16xf32> -> vector<256x16xf32>
    %cst_8 = arith.constant 0.000000e+00 : f32
    %9 = vector.broadcast %cst_8 : f32 to vector<256x16xf32>
    %10 = arith.maximumf %8, %9 : vector<256x16xf32>
    %c0_9 = arith.constant 0 : index
    %c0_10 = arith.constant 0 : index
    %11 = vector.load %arg5[%c0_9, %c0_10] : memref<16x32xf32, #tpu.memory_space<vmem>>, vector<16x32xf32>
    %cst_11 = arith.constant dense<0.000000e+00> : vector<256x32xf32>
    %12 = tpu.matmul %10, %11, %cst_11 {dimension_numbers = #tpu.dot_dimension_numbers<[1], [0], [0], [1], [0, 0, 1, 1], [], []>} : vector<256x16xf32>, vector<16x32xf32>, vector<256x32xf32> -> vector<256x32xf32>
    %c0_12 = arith.constant 0 : index
    %c0_13 = arith.constant 0 : index
    %13 = vector.load %arg6[%c0_12, %c0_13] : memref<1x32xf32, #tpu.memory_space<vmem>>, vector<1x32xf32>
    %14 = vector.broadcast %13 : vector<1x32xf32> to vector<256x32xf32>
    %15 = arith.addf %12, %14 : vector<256x32xf32>
    %16 = arith.truncf %15 : vector<256x32xf32> to vector<256x32xbf16>
    %cst_14 = arith.constant dense<0.000000e+00> : vector<256x32xf32>
    %17 = tpu.matmul %0, %16, %cst_14 {dimension_numbers = #tpu.dot_dimension_numbers<[1], [0], [0], [1], [0, 0, 1, 1], [], []>} : vector<256x256xbf16>, vector<256x32xbf16>, vector<256x32xf32> -> vector<256x32xf32>
    %cst_15 = arith.constant 0.000000e+00 : f32
    %18 = vector.broadcast %cst_15 : f32 to vector<256x32xf32>
    %19 = arith.maximumf %17, %18 : vector<256x32xf32>
    %c0_16 = arith.constant 0 : index
    %c0_17 = arith.constant 0 : index
    %20 = vector.load %arg7[%c0_16, %c0_17] : memref<1x32xf32, #tpu.memory_space<vmem>>, vector<1x32xf32>
    %21 = vector.broadcast %20 : vector<1x32xf32> to vector<256x32xf32>
    %22 = arith.mulf %19, %21 : vector<256x32xf32>
    %cst_18 = arith.constant dense<0.000000e+00> : vector<256xf32>
    %23 = vector.multi_reduction <add>, %22, %cst_18 [1] : vector<256x32xf32> to vector<256xf32>
    %24 = vector.shape_cast %23 : vector<256xf32> to vector<256x1xf32>
    %c0_19 = arith.constant 0 : index
    %c0_20 = arith.constant 0 : index
    %25 = vector.load %arg8[%c0_19, %c0_20] : memref<1x1xf32, #tpu.memory_space<vmem>>, vector<1x1xf32>
    %26 = vector.broadcast %25 : vector<1x1xf32> to vector<256x1xf32>
    %27 = arith.addf %24, %26 : vector<256x1xf32>
    %28 = arith.negf %27 : vector<256x1xf32>
    %29 = math.exp %28 : vector<256x1xf32>
    %cst_21 = arith.constant 1.000000e+00 : f32
    %30 = vector.broadcast %cst_21 : f32 to vector<256x1xf32>
    %31 = arith.addf %30, %29 : vector<256x1xf32>
    %32 = arith.divf %30, %31 : vector<256x1xf32>
    %c0_22 = arith.constant 0 : index
    %c0_23 = arith.constant 0 : index
    %33 = vector.load %arg9[%c0_22, %c0_23] : memref<256x1xf32, #tpu.memory_space<vmem>>, vector<256x1xf32>
    tpu.vector_store %arg9[%c0_22, %c0_23], %32 {strides = array<i32>} : memref<256x1xf32, #tpu.memory_space<vmem>>, vector<256x1xf32>,
    return
  }
  func.func @transform_0(%arg0: i32) -> (i32, i32) {
    %c0_i32 = arith.constant 0 : i32
    %c0_i32_0 = arith.constant 0 : i32
    %c0_i32_1 = arith.constant 0 : i32
    return %c0_i32, %c0_i32_0 : i32, i32
  }
  func.func @transform_1(%arg0: i32) -> (i32, i32) {
    %c0_i32 = arith.constant 0 : i32
    %c0_i32_0 = arith.constant 0 : i32
    %c0_i32_1 = arith.constant 0 : i32
    return %c0_i32, %c0_i32_0 : i32, i32
  }
  func.func @transform_2(%arg0: i32) -> (i32, i32) {
    %c0_i32 = arith.constant 0 : i32
    %c0_i32_0 = arith.constant 0 : i32
    %c0_i32_1 = arith.constant 0 : i32
    return %c0_i32, %c0_i32_0 : i32, i32
  }
  func.func @transform_3(%arg0: i32) -> (i32, i32) {
    %c0_i32 = arith.constant 0 : i32
    %c0_i32_0 = arith.constant 0 : i32
    %c0_i32_1 = arith.constant 0 : i32
    return %c0_i32, %c0_i32_0 : i32, i32
  }
  func.func @transform_4(%arg0: i32) -> (i32, i32) {
    %c0_i32 = arith.constant 0 : i32
    %c0_i32_0 = arith.constant 0 : i32
    %c0_i32_1 = arith.constant 0 : i32
    return %c0_i32, %c0_i32_0 : i32, i32
  }
  func.func @transform_5(%arg0: i32) -> (i32, i32) {
    %c0_i32 = arith.constant 0 : i32
    %c0_i32_0 = arith.constant 0 : i32
    %c0_i32_1 = arith.constant 0 : i32
    return %c0_i32, %c0_i32_0 : i32, i32
  }
  func.func @transform_6(%arg0: i32) -> (i32, i32) {
    %c0_i32 = arith.constant 0 : i32
    %c0_i32_0 = arith.constant 0 : i32
    %c0_i32_1 = arith.constant 0 : i32
    return %c0_i32, %c0_i32_0 : i32, i32
  }
  func.func @transform_7(%arg0: i32) -> (i32, i32) {
    %c0_i32 = arith.constant 0 : i32
    %c0_i32_0 = arith.constant 0 : i32
    %c0_i32_1 = arith.constant 0 : i32
    return %c0_i32, %c0_i32_0 : i32, i32
  }
  func.func @transform_8(%arg0: i32) -> (i32, i32) {
    %c0_i32 = arith.constant 0 : i32
    %c0_i32_0 = arith.constant 0 : i32
    %c0_i32_1 = arith.constant 0 : i32
    return %c0_i32, %c0_i32_0 : i32, i32
  }
}

</mosaic_0001>

<llo_original>
// kernel: tpu_custom_call.1
$region0: #{tpu_custom_call.1}
  #allocation0 [shape = 'u32[]', space=smem, size = 0x4, offset = 0x4, fixed_abs, tag = 'smem constant byte address 0x4 - core index']
  #allocation1 [shape = 'u32[144,128]{1,0:T(1,128)}', space=vmem, size = 0x12000, scoped, tag = 'internal scratch']
  #allocation2 [shape = 'f32[1,1]{1,0:T(1,128)S(1)}', space=vmem, size = 0x200, scoped, tag = 'scoped memory for tpu_custom_call.1']
  %s0 = inlined_call_operand.vmem [shape: f32[256,10], index: 0, kind: input, shape index: {}]
  %s1 = inlined_call_operand.vmem [shape: bf16[256,256], index: 1, kind: input, shape index: {}]
  %s2 = inlined_call_operand.vmem [shape: f32[10,16], index: 2, kind: input, shape index: {}]
  %s3 = inlined_call_operand.vmem [shape: f32[1,16], index: 3, kind: input, shape index: {}]
  %s4 = inlined_call_operand.vmem [shape: f32[16,32], index: 4, kind: input, shape index: {}]
  %s5 = inlined_call_operand.vmem [shape: f32[1,32], index: 5, kind: input, shape index: {}]
  %s6 = inlined_call_operand.vmem [shape: f32[1,32], index: 6, kind: input, shape index: {}]
  %s7 = inlined_call_operand.<no memory space> [shape: f32[1,1], index: 7, kind: input, shape index: {}]
  %s8 = inlined_call_operand.vmem [shape: f32[256,1], index: 8, kind: output, shape index: {}]
  %s9 = sld [smem:[#allocation0]]
  $region42: #{tpu_custom_call.1} parent=0
    _
  %s11 = ssub.s32 1, %s9
  %s12 = scalar_select 0, %s11, %s9
  %v13 = vstv %s7
  %14 = vst [vmem:[#allocation2] sm:$0x1] %v13
  // Predicated region
  $region2: #{tpu_custom_call.1} parent=0 // pred_check
    _
  $region3: #{tpu_custom_call.1} parent=0 // pred_check_branch
    %16 = sbr.rel (0) target = $region5
  $region4: #{tpu_custom_call.1} parent=0 // pred_region
    _
  $region5: #{tpu_custom_call.1} parent=0 // pred_fallthru
    _
  // Predicated region
  $region6: #{tpu_custom_call.1} parent=0 // pred_check
    _
  $region7: #{tpu_custom_call.1} parent=0 // pred_check_branch
    %18 = sbr.rel (0) target = $region9
  $region8: #{tpu_custom_call.1} parent=0 // pred_region
    _
  $region9: #{tpu_custom_call.1} parent=0 // pred_fallthru
    _
  // Predicated region
  $region10: #{tpu_custom_call.1} parent=0 // pred_check
    _
  $region11: #{tpu_custom_call.1} parent=0 // pred_check_branch
    %20 = sbr.rel (0) target = $region13
  $region12: #{tpu_custom_call.1} parent=0 // pred_region
    _
  $region13: #{tpu_custom_call.1} parent=0 // pred_fallthru
    _
  // Predicated region
  $region14: #{tpu_custom_call.1} parent=0 // pred_check
    _
  $region15: #{tpu_custom_call.1} parent=0 // pred_check_branch
    %22 = sbr.rel (0) target = $region17
  $region16: #{tpu_custom_call.1} parent=0 // pred_region
    _
  $region17: #{tpu_custom_call.1} parent=0 // pred_fallthru
    _
  // Predicated region
  $region18: #{tpu_custom_call.1} parent=0 // pred_check
    _
  $region19: #{tpu_custom_call.1} parent=0 // pred_check_branch
    %24 = sbr.rel (0) target = $region21
  $region20: #{tpu_custom_call.1} parent=0 // pred_region
    _
  $region21: #{tpu_custom_call.1} parent=0 // pred_fallthru
    _
  // Predicated region
  $region22: #{tpu_custom_call.1} parent=0 // pred_check
    _
  $region23: #{tpu_custom_call.1} parent=0 // pred_check_branch
    %26 = sbr.rel (0) target = $region25
  $region24: #{tpu_custom_call.1} parent=0 // pred_region
    _
  $region25: #{tpu_custom_call.1} parent=0 // pred_fallthru
    _
  // Predicated region
  $region26: #{tpu_custom_call.1} parent=0 // pred_check
    _
  $region27: #{tpu_custom_call.1} parent=0 // pred_check_branch
    %28 = sbr.rel (0) target = $region29
  $region28: #{tpu_custom_call.1} parent=0 // pred_region
    _
  $region29: #{tpu_custom_call.1} parent=0 // pred_fallthru
    _
  // Predicated region
  $region30: #{tpu_custom_call.1} parent=0 // pred_check
    _
  $region31: #{tpu_custom_call.1} parent=0 // pred_check_branch
    %30 = sbr.rel (0) target = $region33
  $region32: #{tpu_custom_call.1} parent=0 // pred_region
    _
  $region33: #{tpu_custom_call.1} parent=0 // pred_fallthru
    _
  %v32 = vld [vmem:[%s1] sm:$0xff]
  %v33 = vld [vmem:[%s1 + $0x8] sm:$0xff]
  %v34 = vld [vmem:[%s1 + $0x10] sm:$0xff]
  %v35 = vld [vmem:[%s1 + $0x18] sm:$0xff]
  %v36 = vld [vmem:[%s1 + $0x20] sm:$0xff]
  %v37 = vld [vmem:[%s1 + $0x28] sm:$0xff]
  %v38 = vld [vmem:[%s1 + $0x30] sm:$0xff]
  %v39 = vld [vmem:[%s1 + $0x38] sm:$0xff]
  %v40 = vld [vmem:[%s1 + $0x40] sm:$0xff]
  %v41 = vld [vmem:[%s1 + $0x48] sm:$0xff]
  %v42 = vld [vmem:[%s1 + $0x50] sm:$0xff]
  %v43 = vld [vmem:[%s1 + $0x58] sm:$0xff]
  %v44 = vld [vmem:[%s1 + $0x60] sm:$0xff]
  %v45 = vld [vmem:[%s1 + $0x68] sm:$0xff]
  %v46 = vld [vmem:[%s1 + $0x70] sm:$0xff]
  %v47 = vld [vmem:[%s1 + $0x78] sm:$0xff]
  %v48 = vld [vmem:[%s1 + $0x80] sm:$0xff]
  %v49 = vld [vmem:[%s1 + $0x88] sm:$0xff]
  %v50 = vld [vmem:[%s1 + $0x90] sm:$0xff]
  %v51 = vld [vmem:[%s1 + $0x98] sm:$0xff]
  %v52 = vld [vmem:[%s1 + $0xa0] sm:$0xff]
  %v53 = vld [vmem:[%s1 + $0xa8] sm:$0xff]
  %v54 = vld [vmem:[%s1 + $0xb0] sm:$0xff]
  %v55 = vld [vmem:[%s1 + $0xb8] sm:$0xff]
  %v56 = vld [vmem:[%s1 + $0xc0] sm:$0xff]
  %v57 = vld [vmem:[%s1 + $0xc8] sm:$0xff]
  %v58 = vld [vmem:[%s1 + $0xd0] sm:$0xff]
  %v59 = vld [vmem:[%s1 + $0xd8] sm:$0xff]
  %v60 = vld [vmem:[%s1 + $0xe0] sm:$0xff]
  %v61 = vld [vmem:[%s1 + $0xe8] sm:$0xff]
  %v62 = vld [vmem:[%s1 + $0xf0] sm:$0xff]
  %v63 = vld [vmem:[%s1 + $0xf8] sm:$0xff]
  %v64 = vld [vmem:[%s0] sm:$0xff]
  %v65 = vld [vmem:[%s0 + $0x8] sm:$0xff]
  %v66 = vld [vmem:[%s0 + $0x10] sm:$0xff]
  %v67 = vld [vmem:[%s0 + $0x18] sm:$0xff]
  %v68 = vld [vmem:[%s0 + $0x20] sm:$0xff]
  %v69 = vld [vmem:[%s0 + $0x28] sm:$0xff]
  %v70 = vld [vmem:[%s0 + $0x30] sm:$0xff]
  %v71 = vld [vmem:[%s0 + $0x38] sm:$0xff]
  %v72 = vld [vmem:[%s0 + $0x40] sm:$0xff]
  %v73 = vld [vmem:[%s0 + $0x48] sm:$0xff]
  %v74 = vld [vmem:[%s0 + $0x50] sm:$0xff]
  %v75 = vld [vmem:[%s0 + $0x58] sm:$0xff]
  %v76 = vld [vmem:[%s0 + $0x60] sm:$0xff]
  %v77 = vld [vmem:[%s0 + $0x68] sm:$0xff]
  %v78 = vld [vmem:[%s0 + $0x70] sm:$0xff]
  %v79 = vld [vmem:[%s0 + $0x78] sm:$0xff]
  %v80 = vld [vmem:[%s0 + $0x80] sm:$0xff]
  %v81 = vld [vmem:[%s0 + $0x88] sm:$0xff]
  %v82 = vld [vmem:[%s0 + $0x90] sm:$0xff]
  %v83 = vld [vmem:[%s0 + $0x98] sm:$0xff]
  %v84 = vld [vmem:[%s0 + $0xa0] sm:$0xff]
  %v85 = vld [vmem:[%s0 + $0xa8] sm:$0xff]
  %v86 = vld [vmem:[%s0 + $0xb0] sm:$0xff]
  %v87 = vld [vmem:[%s0 + $0xb8] sm:$0xff]
  %v88 = vld [vmem:[%s0 + $0xc0] sm:$0xff]
  %v89 = vld [vmem:[%s0 + $0xc8] sm:$0xff]
  %v90 = vld [vmem:[%s0 + $0xd0] sm:$0xff]
  %v91 = vld [vmem:[%s0 + $0xd8] sm:$0xff]
  %v92 = vld [vmem:[%s0 + $0xe0] sm:$0xff]
  %v93 = vld [vmem:[%s0 + $0xe8] sm:$0xff]
  %v94 = vld [vmem:[%s0 + $0xf0] sm:$0xff]
  %v95 = vld [vmem:[%s0 + $0xf8] sm:$0xff]
  %v96 = vld [vmem:[%s2] sm:$0xff]
  %v97 = vld [vmem:[%s2 + $0x8] sm:$0x3]
  %v98 = vld [vmem:[%s3] sm:$0x1]
  %v100 = vlaneseq
  %v101 = vshrl.u32 %v100, 7
  %v102 = vsub.s32 0, %v101
  %v103 = vrot.slane %v98, %v102
  %vm105 = vcmask 80896
  %v107 = vsel %vm105, %v64, 0
  %v110 = vsel %vm105, %v65, 0
  %v113 = vsel %vm105, %v66, 0
  %v116 = vsel %vm105, %v67, 0
  %v119 = vsel %vm105, %v68, 0
  %v122 = vsel %vm105, %v69, 0
  %v125 = vsel %vm105, %v70, 0
  %v128 = vsel %vm105, %v71, 0
  %v131 = vsel %vm105, %v72, 0
  %v134 = vsel %vm105, %v73, 0
  %v137 = vsel %vm105, %v74, 0
  %v140 = vsel %vm105, %v75, 0
  %v143 = vsel %vm105, %v76, 0
  %v146 = vsel %vm105, %v77, 0
  %v149 = vsel %vm105, %v78, 0
  %v152 = vsel %vm105, %v79, 0
  %v155 = vsel %vm105, %v80, 0
  %v158 = vsel %vm105, %v81, 0
  %v161 = vsel %vm105, %v82, 0
  %v164 = vsel %vm105, %v83, 0
  %v167 = vsel %vm105, %v84, 0
  %v170 = vsel %vm105, %v85, 0
  %v173 = vsel %vm105, %v86, 0
  %v176 = vsel %vm105, %v87, 0
  %v179 = vsel %vm105, %v88, 0
  %v182 = vsel %vm105, %v89, 0
  %v185 = vsel %vm105, %v90, 0
  %v188 = vsel %vm105, %v91, 0
  %v191 = vsel %vm105, %v92, 0
  %v194 = vsel %vm105, %v93, 0
  %v197 = vsel %vm105, %v94, 0
  %v200 = vsel %vm105, %v95, 0
  %vm202 = vcmask 1041408
  %v204 = vsel %vm202, %v97, 0
  %206 = vmatprep.subr.mxu0 0.0
  %207 = vmatpush1.msra.mxu0 %v96
  %208 = vmatprep.subr.mxu0 0.0
  %209 = vmatpush1.msra.mxu0 %v204
  %210 = vmatprep.subr.mxu0 0.0
  %211 = vmatpush1.msra.mxu0 0.0
  %212 = vmatprep.subr.mxu0 0.0
  %213 = vmatpush1.msra.mxu0 0.0
  %214 = vmatprep.subr.mxu0 0.0
  %215 = vmatpush1.msra.mxu0 0.0
  %216 = vmatprep.subr.mxu0 0.0
  %217 = vmatpush1.msra.mxu0 0.0
  %218 = vmatprep.subr.mxu0 0.0
  %219 = vmatpush1.msra.mxu0 0.0
  %220 = vmatprep.subr.mxu0 0.0
  %221 = vmatpush1.msra.mxu0 0.0
  %222 = vmatprep.subr.mxu0 0.0
  %223 = vmatpush1.msra.mxu0 0.0
  %224 = vmatprep.subr.mxu0 0.0
  %225 = vmatpush1.msra.mxu0 0.0
  %226 = vmatprep.subr.mxu0 0.0
  %227 = vmatpush1.msra.mxu0 0.0
  %228 = vmatprep.subr.mxu0 0.0
  %229 = vmatpush1.msra.mxu0 0.0
  %230 = vmatprep.subr.mxu0 0.0
  %231 = vmatpush1.msra.mxu0 0.0
  %232 = vmatprep.subr.mxu0 0.0
  %233 = vmatpush1.msra.mxu0 0.0
  %234 = vmatprep.subr.mxu0 0.0
  %235 = vmatpush1.msra.mxu0 0.0
  %236 = vmatprep.subr.mxu0 0.0
  %237 = vmatpush1.msra.mxu0 0.0
  %238 = vmatprep.subr.mxu0 0.0
  %239 = vmatpush1.msra.mxu0 0.0
  %240 = vmatprep.subr.mxu0 0.0
  %241 = vmatpush1.msra.mxu0 0.0
  %242 = vmatprep.subr.mxu0 0.0
  %243 = vmatpush1.msra.mxu0 0.0
  %244 = vmatprep.subr.mxu0 0.0
  %245 = vmatpush1.msra.mxu0 0.0
  %246 = vmatprep.subr.mxu0 0.0
  %247 = vmatpush1.msra.mxu0 0.0
  %248 = vmatprep.subr.mxu0 0.0
  %249 = vmatpush1.msra.mxu0 0.0
  %250 = vmatprep.subr.mxu0 0.0
  %251 = vmatpush1.msra.mxu0 0.0
  %252 = vmatprep.subr.mxu0 0.0
  %253 = vmatpush1.msra.mxu0 0.0
  %254 = vmatprep.subr.mxu0 0.0
  %255 = vmatpush1.msra.mxu0 0.0
  %256 = vmatprep.subr.mxu0 0.0
  %257 = vmatpush1.msra.mxu0 0.0
  %258 = vmatprep.subr.mxu0 0.0
  %259 = vmatpush1.msra.mxu0 0.0
  %260 = vmatprep.subr.mxu0 0.0
  %261 = vmatpush1.msra.mxu0 0.0
  %262 = vmatprep.subr.mxu0 0.0
  %263 = vmatpush1.msra.mxu0 0.0
  %264 = vmatprep.subr.mxu0 0.0
  %265 = vmatpush1.msra.mxu0 0.0
  %266 = vmatprep.subr.mxu0 0.0
  %267 = vmatpush1.msra.mxu0 0.0
  %268 = vmatprep.subr.mxu0 0.0
  %269 = vmatpush1.msra.mxu0 0.0
  %270 = vmatprep.mubr.f32.mxu0 0.0
  %271 = vmatmul.mubr.f32.gmra.mrb[0].mxu0 %v107
  %v272 = vpop.f32.mrb[0].mxu0
  %v273 = vadd.f32 %v103, %v272
  %v274 = vpop.f32.mrb[0].mxu0
  %275 = vmatprep.mubr.f32.mxu0 0.0
  %276 = vmatmul.mubr.f32.gmra.mrb[0].mxu0 %v110
  %v277 = vpop.f32.mrb[0].mxu0
  %v278 = vadd.f32 %v103, %v277
  %v279 = vpop.f32.mrb[0].mxu0
  %280 = vmatprep.mubr.f32.mxu0 0.0
  %281 = vmatmul.mubr.f32.gmra.mrb[0].mxu0 %v113
  %v282 = vpop.f32.mrb[0].mxu0
  %v283 = vadd.f32 %v103, %v282
  %v284 = vpop.f32.mrb[0].mxu0
  %285 = vmatprep.mubr.f32.mxu0 0.0
  %286 = vmatmul.mubr.f32.gmra.mrb[0].mxu0 %v116
  %v287 = vpop.f32.mrb[0].mxu0
  %v288 = vadd.f32 %v103, %v287
  %v289 = vpop.f32.mrb[0].mxu0
  %290 = vmatprep.mubr.f32.mxu0 0.0
  %291 = vmatmul.mubr.f32.gmra.mrb[0].mxu0 %v119
  %v292 = vpop.f32.mrb[0].mxu0
  %v293 = vadd.f32 %v103, %v292
  %v294 = vpop.f32.mrb[0].mxu0
  %295 = vmatprep.mubr.f32.mxu0 0.0
  %296 = vmatmul.mubr.f32.gmra.mrb[0].mxu0 %v122
  %v297 = vpop.f32.mrb[0].mxu0
  %v298 = vadd.f32 %v103, %v297
  %v299 = vpop.f32.mrb[0].mxu0
  %300 = vmatprep.mubr.f32.mxu0 0.0
  %301 = vmatmul.mubr.f32.gmra.mrb[0].mxu0 %v125
  %v302 = vpop.f32.mrb[0].mxu0
  %v303 = vadd.f32 %v103, %v302
  %v304 = vpop.f32.mrb[0].mxu0
  %305 = vmatprep.mubr.f32.mxu0 0.0
  %306 = vmatmul.mubr.f32.gmra.mrb[0].mxu0 %v128
  %v307 = vpop.f32.mrb[0].mxu0
  %v308 = vadd.f32 %v103, %v307
  %v309 = vpop.f32.mrb[0].mxu0
  %310 = vmatprep.mubr.f32.mxu0 0.0
  %311 = vmatmul.mubr.f32.gmra.mrb[0].mxu0 %v131
  %v312 = vpop.f32.mrb[0].mxu0
  %v313 = vadd.f32 %v103, %v312
  %v314 = vpop.f32.mrb[0].mxu0
  %315 = vmatprep.mubr.f32.mxu0 0.0
  %316 = vmatmul.mubr.f32.gmra.mrb[0].mxu0 %v134
  %v317 = vpop.f32.mrb[0].mxu0
  %v318 = vadd.f32 %v103, %v317
  %v319 = vpop.f32.mrb[0].mxu0
  %320 = vmatprep.mubr.f32.mxu0 0.0
  %321 = vmatmul.mubr.f32.gmra.mrb[0].mxu0 %v137
  %v322 = vpop.f32.mrb[0].mxu0
  %v323 = vadd.f32 %v103, %v322
  %v324 = vpop.f32.mrb[0].mxu0
  %325 = vmatprep.mubr.f32.mxu0 0.0
  %326 = vmatmul.mubr.f32.gmra.mrb[0].mxu0 %v140
  %v327 = vpop.f32.mrb[0].mxu0
  %v328 = vadd.f32 %v103, %v327
  %v329 = vpop.f32.mrb[0].mxu0
  %330 = vmatprep.mubr.f32.mxu0 0.0
  %331 = vmatmul.mubr.f32.gmra.mrb[0].mxu0 %v143
  %v332 = vpop.f32.mrb[0].mxu0
  %v333 = vadd.f32 %v103, %v332
  %v334 = vpop.f32.mrb[0].mxu0
  %335 = vmatprep.mubr.f32.mxu0 0.0
  %336 = vmatmul.mubr.f32.gmra.mrb[0].mxu0 %v146
  %v337 = vpop.f32.mrb[0].mxu0
  %v338 = vadd.f32 %v103, %v337
  %v339 = vpop.f32.mrb[0].mxu0
  %340 = vmatprep.mubr.f32.mxu0 0.0
  %341 = vmatmul.mubr.f32.gmra.mrb[0].mxu0 %v149
  %v342 = vpop.f32.mrb[0].mxu0
  %v343 = vadd.f32 %v103, %v342
  %v344 = vpop.f32.mrb[0].mxu0
  %345 = vmatprep.mubr.f32.mxu0 0.0
  %346 = vmatmul.mubr.f32.gmra.mrb[0].mxu0 %v152
  %v347 = vpop.f32.mrb[0].mxu0
  %v348 = vadd.f32 %v103, %v347
  %v349 = vpop.f32.mrb[0].mxu0
  %350 = vmatprep.mubr.f32.mxu0 0.0
  %351 = vmatmul.mubr.f32.gmra.mrb[0].mxu0 %v155
  %v352 = vpop.f32.mrb[0].mxu0
  %v353 = vadd.f32 %v103, %v352
  %v354 = vpop.f32.mrb[0].mxu0
  %355 = vmatprep.mubr.f32.mxu0 0.0
  %356 = vmatmul.mubr.f32.gmra.mrb[0].mxu0 %v158
  %v357 = vpop.f32.mrb[0].mxu0
  %v358 = vadd.f32 %v103, %v357
  %v359 = vpop.f32.mrb[0].mxu0
  %360 = vmatprep.mubr.f32.mxu0 0.0
  %361 = vmatmul.mubr.f32.gmra.mrb[0].mxu0 %v161
  %v362 = vpop.f32.mrb[0].mxu0
  %v363 = vadd.f32 %v103, %v362
  %v364 = vpop.f32.mrb[0].mxu0
  %365 = vmatprep.mubr.f32.mxu0 0.0
  %366 = vmatmul.mubr.f32.gmra.mrb[0].mxu0 %v164
  %v367 = vpop.f32.mrb[0].mxu0
  %v368 = vadd.f32 %v103, %v367
  %v369 = vpop.f32.mrb[0].mxu0
  %370 = vmatprep.mubr.f32.mxu0 0.0
  %371 = vmatmul.mubr.f32.gmra.mrb[0].mxu0 %v167
  %v372 = vpop.f32.mrb[0].mxu0
  %v373 = vadd.f32 %v103, %v372
  %v374 = vpop.f32.mrb[0].mxu0
  %375 = vmatprep.mubr.f32.mxu0 0.0
  %376 = vmatmul.mubr.f32.gmra.mrb[0].mxu0 %v170
  %v377 = vpop.f32.mrb[0].mxu0
  %v378 = vadd.f32 %v103, %v377
  %v379 = vpop.f32.mrb[0].mxu0
  %380 = vmatprep.mubr.f32.mxu0 0.0
  %381 = vmatmul.mubr.f32.gmra.mrb[0].mxu0 %v173
  %v382 = vpop.f32.mrb[0].mxu0
  %v383 = vadd.f32 %v103, %v382
  %v384 = vpop.f32.mrb[0].mxu0
  %385 = vmatprep.mubr.f32.mxu0 0.0
  %386 = vmatmul.mubr.f32.gmra.mrb[0].mxu0 %v176
  %v387 = vpop.f32.mrb[0].mxu0
  %v388 = vadd.f32 %v103, %v387
  %v389 = vpop.f32.mrb[0].mxu0
  %390 = vmatprep.mubr.f32.mxu0 0.0
  %391 = vmatmul.mubr.f32.gmra.mrb[0].mxu0 %v179
  %v392 = vpop.f32.mrb[0].mxu0
  %v393 = vadd.f32 %v103, %v392
  %v394 = vpop.f32.mrb[0].mxu0
  %395 = vmatprep.mubr.f32.mxu0 0.0
  %396 = vmatmul.mubr.f32.gmra.mrb[0].mxu0 %v182
  %v397 = vpop.f32.mrb[0].mxu0
  %v398 = vadd.f32 %v103, %v397
  %v399 = vpop.f32.mrb[0].mxu0
  %400 = vmatprep.mubr.f32.mxu0 0.0
  %401 = vmatmul.mubr.f32.gmra.mrb[0].mxu0 %v185
  %v402 = vpop.f32.mrb[0].mxu0
  %v403 = vadd.f32 %v103, %v402
  %v404 = vpop.f32.mrb[0].mxu0
  %405 = vmatprep.mubr.f32.mxu0 0.0
  %406 = vmatmul.mubr.f32.gmra.mrb[0].mxu0 %v188
  %v407 = vpop.f32.mrb[0].mxu0
  %v408 = vadd.f32 %v103, %v407
  %v409 = vpop.f32.mrb[0].mxu0
  %410 = vmatprep.mubr.f32.mxu0 0.0
  %411 = vmatmul.mubr.f32.gmra.mrb[0].mxu0 %v191
  %v412 = vpop.f32.mrb[0].mxu0
  %v413 = vadd.f32 %v103, %v412
  %v414 = vpop.f32.mrb[0].mxu0
  %415 = vmatprep.mubr.f32.mxu0 0.0
  %416 = vmatmul.mubr.f32.gmra.mrb[0].mxu0 %v194
  %v417 = vpop.f32.mrb[0].mxu0
  %v418 = vadd.f32 %v103, %v417
  %v419 = vpop.f32.mrb[0].mxu0
  %420 = vmatprep.mubr.f32.mxu0 0.0
  %421 = vmatmul.mubr.f32.gmra.mrb[0].mxu0 %v197
  %v422 = vpop.f32.mrb[0].mxu0
  %v423 = vadd.f32 %v103, %v422
  %v424 = vpop.f32.mrb[0].mxu0
  %425 = vmatprep.mubr.f32.mxu0 0.0
  %426 = vmatmul.mubr.f32.gmra.mrb[0].mxu0 %v200
  %v427 = vpop.f32.mrb[0].mxu0
  %v428 = vadd.f32 %v103, %v427
  %v429 = vpop.f32.mrb[0].mxu0
  %430 = vdwg.mxu0
  %v431 = vpack.c.bf16 %v278, %v273
  %v432 = vpack.c.bf16 %v288, %v283
  %v433 = vpack.c.bf16 %v298, %v293
  %v434 = vpack.c.bf16 %v308, %v303
  %v435 = vpack.c.bf16 %v318, %v313
  %v436 = vpack.c.bf16 %v328, %v323
  %v437 = vpack.c.bf16 %v338, %v333
  %v438 = vpack.c.bf16 %v348, %v343
  %v439 = vpack.c.bf16 %v358, %v353
  %v440 = vpack.c.bf16 %v368, %v363
  %v441 = vpack.c.bf16 %v378, %v373
  %v442 = vpack.c.bf16 %v388, %v383
  %v443 = vpack.c.bf16 %v398, %v393
  %v444 = vpack.c.bf16 %v408, %v403
  %v445 = vpack.c.bf16 %v418, %v413
  %v446 = vpack.c.bf16 %v428, %v423
  %v479 = vunpack.c.l.b16 %v32
  %v480 = vunpack.c.h.b16 %v32
  %v481 = vunpack.c.l.b16 %v33
  %v482 = vunpack.c.h.b16 %v33
  %v483 = vunpack.c.l.b16 %v34
  %v484 = vunpack.c.h.b16 %v34
  %v485 = vunpack.c.l.b16 %v35
  %v486 = vunpack.c.h.b16 %v35
  %v487 = vunpack.c.l.b16 %v36
  %v488 = vunpack.c.h.b16 %v36
  %v489 = vunpack.c.l.b16 %v37
  %v490 = vunpack.c.h.b16 %v37
  %v491 = vunpack.c.l.b16 %v38
  %v492 = vunpack.c.h.b16 %v38
  %v493 = vunpack.c.l.b16 %v39
  %v494 = vunpack.c.h.b16 %v39
  %v495 = vunpack.c.l.b16 %v40
  %v496 = vunpack.c.h.b16 %v40
  %v497 = vunpack.c.l.b16 %v41
  %v498 = vunpack.c.h.b16 %v41
  %v499 = vunpack.c.l.b16 %v42
  %v500 = vunpack.c.h.b16 %v42
  %v501 = vunpack.c.l.b16 %v43
  %v502 = vunpack.c.h.b16 %v43
  %v503 = vunpack.c.l.b16 %v44
  %v504 = vunpack.c.h.b16 %v44
  %v505 = vunpack.c.l.b16 %v45
  %v506 = vunpack.c.h.b16 %v45
  %v507 = vunpack.c.l.b16 %v46
  %v508 = vunpack.c.h.b16 %v46
  %v509 = vunpack.c.l.b16 %v47
  %v510 = vunpack.c.h.b16 %v47
  %v511 = vunpack.c.l.b16 %v48
  %v512 = vunpack.c.h.b16 %v48
  %v513 = vunpack.c.l.b16 %v49
  %v514 = vunpack.c.h.b16 %v49
  %v515 = vunpack.c.l.b16 %v50
  %v516 = vunpack.c.h.b16 %v50
  %v517 = vunpack.c.l.b16 %v51
  %v518 = vunpack.c.h.b16 %v51
  %v519 = vunpack.c.l.b16 %v52
  %v520 = vunpack.c.h.b16 %v52
  %v521 = vunpack.c.l.b16 %v53
  %v522 = vunpack.c.h.b16 %v53
  %v523 = vunpack.c.l.b16 %v54
  %v524 = vunpack.c.h.b16 %v54
  %v525 = vunpack.c.l.b16 %v55
  %v526 = vunpack.c.h.b16 %v55
  %v527 = vunpack.c.l.b16 %v56
  %v528 = vunpack.c.h.b16 %v56
  %v529 = vunpack.c.l.b16 %v57
  %v530 = vunpack.c.h.b16 %v57
  %v531 = vunpack.c.l.b16 %v58
  %v532 = vunpack.c.h.b16 %v58
  %v533 = vunpack.c.l.b16 %v59
  %v534 = vunpack.c.h.b16 %v59
  %v535 = vunpack.c.l.b16 %v60
  %v536 = vunpack.c.h.b16 %v60
  %v537 = vunpack.c.l.b16 %v61
  %v538 = vunpack.c.h.b16 %v61
  %v539 = vunpack.c.l.b16 %v62
  %v540 = vunpack.c.h.b16 %v62
  %v541 = vunpack.c.l.b16 %v63
  %v542 = vunpack.c.h.b16 %v63
  %v543 = vpack.c.b16 %v481, %v479
  %v544 = vpack.c.b16 %v482, %v480
  %v545 = vpack.c.b16 %v485, %v483
  %v546 = vpack.c.b16 %v486, %v484
  %v547 = vpack.c.b16 %v489, %v487
  %v548 = vpack.c.b16 %v490, %v488
  %v549 = vpack.c.b16 %v493, %v491
  %v550 = vpack.c.b16 %v494, %v492
  %v551 = vpack.c.b16 %v497, %v495
  %v552 = vpack.c.b16 %v498, %v496
  %v553 = vpack.c.b16 %v501, %v499
  %v554 = vpack.c.b16 %v502, %v500
  %v555 = vpack.c.b16 %v505, %v503
  %v556 = vpack.c.b16 %v506, %v504
  %v557 = vpack.c.b16 %v509, %v507
  %v558 = vpack.c.b16 %v510, %v508
  %v559 = vpack.c.b16 %v513, %v511
  %v560 = vpack.c.b16 %v514, %v512
  %v561 = vpack.c.b16 %v517, %v515
  %v562 = vpack.c.b16 %v518, %v516
  %v563 = vpack.c.b16 %v521, %v519
  %v564 = vpack.c.b16 %v522, %v520
  %v565 = vpack.c.b16 %v525, %v523
  %v566 = vpack.c.b16 %v526, %v524
  %v567 = vpack.c.b16 %v529, %v527
  %v568 = vpack.c.b16 %v530, %v528
  %v569 = vpack.c.b16 %v533, %v531
  %v570 = vpack.c.b16 %v534, %v532
  %v571 = vpack.c.b16 %v537, %v535
  %v572 = vpack.c.b16 %v538, %v536
  %v573 = vpack.c.b16 %v541, %v539
  %v574 = vpack.c.b16 %v542, %v540
  %607 = vmatprep.subr.bf16.mxu0 0
  %608 = vmatpush1.bf16.msra.mxu0 %v431
  %609 = vmatprep.subr.bf16.mxu0 0
  %610 = vmatpush1.bf16.msra.mxu0 %v432
  %611 = vmatprep.subr.bf16.mxu0 0
  %612 = vmatpush1.bf16.msra.mxu0 %v433
  %613 = vmatprep.subr.bf16.mxu0 0
  %614 = vmatpush1.bf16.msra.mxu0 %v434
  %615 = vmatprep.subr.bf16.mxu0 0
  %616 = vmatpush1.bf16.msra.mxu0 %v435
  %617 = vmatprep.subr.bf16.mxu0 0
  %618 = vmatpush1.bf16.msra.mxu0 %v436
  %619 = vmatprep.subr.bf16.mxu0 0
  %620 = vmatpush1.bf16.msra.mxu0 %v437
  %621 = vmatprep.subr.bf16.mxu0 0
  %622 = vmatpush1.bf16.msra.mxu0 %v438
  %623 = vmatprep.subr.bf16.mxu0 0
  %624 = vmatpush1.bf16.msra.mxu0 %v439
  %625 = vmatprep.subr.bf16.mxu0 0
  %626 = vmatpush1.bf16.msra.mxu0 %v440
  %627 = vmatprep.subr.bf16.mxu0 0
  %628 = vmatpush1.bf16.msra.mxu0 %v441
  %629 = vmatprep.subr.bf16.mxu0 0
  %630 = vmatpush1.bf16.msra.mxu0 %v442
  %631 = vmatprep.subr.bf16.mxu0 0
  %632 = vmatpush1.bf16.msra.mxu0 %v443
  %633 = vmatprep.subr.bf16.mxu0 0
  %634 = vmatpush1.bf16.msra.mxu0 %v444
  %635 = vmatprep.subr.bf16.mxu0 0
  %636 = vmatpush1.bf16.msra.mxu0 %v445
  %637 = vmatprep.subr.bf16.mxu0 0
  %638 = vmatpush1.bf16.msra.mxu0 %v446
  %639 = vmatprep.mubr.bf16.mxu0 %v544
  %640 = vmatmul.mubr.bf16.gmra.mrb[0].mxu0 %v543
  %v641 = vpop.f32.mrb[0].mxu0
  %v642 = vadd.f32 0.0, %v641
  %v643 = vpop.f32.mrb[0].mxu0
  %v644 = vpop.f32.mrb[0].mxu0
  %v645 = vadd.f32 0.0, %v644
  %v646 = vpop.f32.mrb[0].mxu0
  %647 = vmatprep.mubr.bf16.mxu0 %v546
  %648 = vmatmul.mubr.bf16.gmra.mrb[0].mxu0 %v545
  %v649 = vpop.f32.mrb[0].mxu0
  %v650 = vadd.f32 0.0, %v649
  %v651 = vpop.f32.mrb[0].mxu0
  %v652 = vpop.f32.mrb[0].mxu0
  %v653 = vadd.f32 0.0, %v652
  %v654 = vpop.f32.mrb[0].mxu0
  %655 = vmatprep.mubr.bf16.mxu0 %v548
  %656 = vmatmul.mubr.bf16.gmra.mrb[0].mxu0 %v547
  %v657 = vpop.f32.mrb[0].mxu0
  %v658 = vadd.f32 0.0, %v657
  %v659 = vpop.f32.mrb[0].mxu0
  %v660 = vpop.f32.mrb[0].mxu0
  %v661 = vadd.f32 0.0, %v660
  %v662 = vpop.f32.mrb[0].mxu0
  %663 = vmatprep.mubr.bf16.mxu0 %v550
  %664 = vmatmul.mubr.bf16.gmra.mrb[0].mxu0 %v549
  %v665 = vpop.f32.mrb[0].mxu0
  %v666 = vadd.f32 0.0, %v665
  %v667 = vpop.f32.mrb[0].mxu0
  %v668 = vpop.f32.mrb[0].mxu0
  %v669 = vadd.f32 0.0, %v668
  %v670 = vpop.f32.mrb[0].mxu0
  %671 = vmatprep.mubr.bf16.mxu0 %v552
  %672 = vmatmul.mubr.bf16.gmra.mrb[0].mxu0 %v551
  %v673 = vpop.f32.mrb[0].mxu0
  %v674 = vadd.f32 0.0, %v673
  %v675 = vpop.f32.mrb[0].mxu0
  %v676 = vpop.f32.mrb[0].mxu0
  %v677 = vadd.f32 0.0, %v676
  %v678 = vpop.f32.mrb[0].mxu0
  %679 = vmatprep.mubr.bf16.mxu0 %v554
  %680 = vmatmul.mubr.bf16.gmra.mrb[0].mxu0 %v553
  %v681 = vpop.f32.mrb[0].mxu0
  %v682 = vadd.f32 0.0, %v681
  %v683 = vpop.f32.mrb[0].mxu0
  %v684 = vpop.f32.mrb[0].mxu0
  %v685 = vadd.f32 0.0, %v684
  %v686 = vpop.f32.mrb[0].mxu0
  %687 = vmatprep.mubr.bf16.mxu0 %v556
  %688 = vmatmul.mubr.bf16.gmra.mrb[0].mxu0 %v555
  %v689 = vpop.f32.mrb[0].mxu0
  %v690 = vadd.f32 0.0, %v689
  %v691 = vpop.f32.mrb[0].mxu0
  %v692 = vpop.f32.mrb[0].mxu0
  %v693 = vadd.f32 0.0, %v692
  %v694 = vpop.f32.mrb[0].mxu0
  %695 = vmatprep.mubr.bf16.mxu0 %v558
  %696 = vmatmul.mubr.bf16.gmra.mrb[0].mxu0 %v557
  %v697 = vpop.f32.mrb[0].mxu0
  %v698 = vadd.f32 0.0, %v697
  %v699 = vpop.f32.mrb[0].mxu0
  %v700 = vpop.f32.mrb[0].mxu0
  %v701 = vadd.f32 0.0, %v700
  %v702 = vpop.f32.mrb[0].mxu0
  %703 = vmatprep.mubr.bf16.mxu0 %v560
  %704 = vmatmul.mubr.bf16.gmra.mrb[0].mxu0 %v559
  %v705 = vpop.f32.mrb[0].mxu0
  %v706 = vadd.f32 0.0, %v705
  %v707 = vpop.f32.mrb[0].mxu0
  %v708 = vpop.f32.mrb[0].mxu0
  %v709 = vadd.f32 0.0, %v708
  %v710 = vpop.f32.mrb[0].mxu0
  %711 = vmatprep.mubr.bf16.mxu0 %v562
  %712 = vmatmul.mubr.bf16.gmra.mrb[0].mxu0 %v561
  %v713 = vpop.f32.mrb[0].mxu0
  %v714 = vadd.f32 0.0, %v713
  %v715 = vpop.f32.mrb[0].mxu0
  %v716 = vpop.f32.mrb[0].mxu0
  %v717 = vadd.f32 0.0, %v716
  %v718 = vpop.f32.mrb[0].mxu0
  %719 = vmatprep.mubr.bf16.mxu0 %v564
  %720 = vmatmul.mubr.bf16.gmra.mrb[0].mxu0 %v563
  %v721 = vpop.f32.mrb[0].mxu0
  %v722 = vadd.f32 0.0, %v721
  %v723 = vpop.f32.mrb[0].mxu0
  %v724 = vpop.f32.mrb[0].mxu0
  %v725 = vadd.f32 0.0, %v724
  %v726 = vpop.f32.mrb[0].mxu0
  %727 = vmatprep.mubr.bf16.mxu0 %v566
  %728 = vmatmul.mubr.bf16.gmra.mrb[0].mxu0 %v565
  %v729 = vpop.f32.mrb[0].mxu0
  %v730 = vadd.f32 0.0, %v729
  %v731 = vpop.f32.mrb[0].mxu0
  %v732 = vpop.f32.mrb[0].mxu0
  %v733 = vadd.f32 0.0, %v732
  %v734 = vpop.f32.mrb[0].mxu0
  %735 = vmatprep.mubr.bf16.mxu0 %v568
  %736 = vmatmul.mubr.bf16.gmra.mrb[0].mxu0 %v567
  %v737 = vpop.f32.mrb[0].mxu0
  %v738 = vadd.f32 0.0, %v737
  %v739 = vpop.f32.mrb[0].mxu0
  %v740 = vpop.f32.mrb[0].mxu0
  %v741 = vadd.f32 0.0, %v740
  %v742 = vpop.f32.mrb[0].mxu0
  %743 = vmatprep.mubr.bf16.mxu0 %v570
  %744 = vmatmul.mubr.bf16.gmra.mrb[0].mxu0 %v569
  %v745 = vpop.f32.mrb[0].mxu0
  %v746 = vadd.f32 0.0, %v745
  %v747 = vpop.f32.mrb[0].mxu0
  %v748 = vpop.f32.mrb[0].mxu0
  %v749 = vadd.f32 0.0, %v748
  %v750 = vpop.f32.mrb[0].mxu0
  %751 = vmatprep.mubr.bf16.mxu0 %v572
  %752 = vmatmul.mubr.bf16.gmra.mrb[0].mxu0 %v571
  %v753 = vpop.f32.mrb[0].mxu0
  %v754 = vadd.f32 0.0, %v753
  %v755 = vpop.f32.mrb[0].mxu0
  %v756 = vpop.f32.mrb[0].mxu0
  %v757 = vadd.f32 0.0, %v756
  %v758 = vpop.f32.mrb[0].mxu0
  %759 = vmatprep.mubr.bf16.mxu0 %v574
  %760 = vmatmul.mubr.bf16.gmra.mrb[0].mxu0 %v573
  %v761 = vpop.f32.mrb[0].mxu0
  %v762 = vadd.f32 0.0, %v761
  %v763 = vpop.f32.mrb[0].mxu0
  %v764 = vpop.f32.mrb[0].mxu0
  %v765 = vadd.f32 0.0, %v764
  %v766 = vpop.f32.mrb[0].mxu0
  %767 = vdwg.mxu0
  %v768 = vmax.f32 %v642, 0.0
  %v769 = vmax.f32 %v645, 0.0
  %v770 = vmax.f32 %v650, 0.0
  %v771 = vmax.f32 %v653, 0.0
  %v772 = vmax.f32 %v658, 0.0
  %v773 = vmax.f32 %v661, 0.0
  %v774 = vmax.f32 %v666, 0.0
  %v775 = vmax.f32 %v669, 0.0
  %v776 = vmax.f32 %v674, 0.0
  %v777 = vmax.f32 %v677, 0.0
  %v778 = vmax.f32 %v682, 0.0
  %v779 = vmax.f32 %v685, 0.0
  %v780 = vmax.f32 %v690, 0.0
  %v781 = vmax.f32 %v693, 0.0
  %v782 = vmax.f32 %v698, 0.0
  %v783 = vmax.f32 %v701, 0.0
  %v784 = vmax.f32 %v706, 0.0
  %v785 = vmax.f32 %v709, 0.0
  %v786 = vmax.f32 %v714, 0.0
  %v787 = vmax.f32 %v717, 0.0
  %v788 = vmax.f32 %v722, 0.0
  %v789 = vmax.f32 %v725, 0.0
  %v790 = vmax.f32 %v730, 0.0
  %v791 = vmax.f32 %v733, 0.0
  %v792 = vmax.f32 %v738, 0.0
  %v793 = vmax.f32 %v741, 0.0
  %v794 = vmax.f32 %v746, 0.0
  %v795 = vmax.f32 %v749, 0.0
  %v796 = vmax.f32 %v754, 0.0
  %v797 = vmax.f32 %v757, 0.0
  %v798 = vmax.f32 %v762, 0.0
  %v799 = vmax.f32 %v765, 0.0
  %v800 = vld [vmem:[%s4] sm:$0xff]
  %v801 = vld [vmem:[%s4 + $0x8] sm:$0xff]
  %v802 = vld [vmem:[%s5] sm:$0x1]
  %v804 = vlaneseq
  %v805 = vshrl.u32 %v804, 7
  %v806 = vsub.s32 0, %v805
  %v807 = vrot.slane %v802, %v806
  %vm809 = vcmask 130048
  %v811 = vsel %vm809, %v768, 0
  %v814 = vsel %vm809, %v769, 0
  %v817 = vsel %vm809, %v770, 0
  %v820 = vsel %vm809, %v771, 0
  %v823 = vsel %vm809, %v772, 0
  %v826 = vsel %vm809, %v773, 0
  %v829 = vsel %vm809, %v774, 0
  %v832 = vsel %vm809, %v775, 0
  %v835 = vsel %vm809, %v776, 0
  %v838 = vsel %vm809, %v777, 0
  %v841 = vsel %vm809, %v778, 0
  %v844 = vsel %vm809, %v779, 0
  %v847 = vsel %vm809, %v780, 0
  %v850 = vsel %vm809, %v781, 0
  %v853 = vsel %vm809, %v782, 0
  %v856 = vsel %vm809, %v783, 0
  %v859 = vsel %vm809, %v784, 0
  %v862 = vsel %vm809, %v785, 0
  %v865 = vsel %vm809, %v786, 0
  %v868 = vsel %vm809, %v787, 0
  %v871 = vsel %vm809, %v788, 0
  %v874 = vsel %vm809, %v789, 0
  %v877 = vsel %vm809, %v790, 0
  %v880 = vsel %vm809, %v791, 0
  %v883 = vsel %vm809, %v792, 0
  %v886 = vsel %vm809, %v793, 0
  %v889 = vsel %vm809, %v794, 0
  %v892 = vsel %vm809, %v795, 0
  %v895 = vsel %vm809, %v796, 0
  %v898 = vsel %vm809, %v797, 0
  %v901 = vsel %vm809, %v798, 0
  %v904 = vsel %vm809, %v799, 0
  %906 = vmatprep.subr.mxu0 0.0
  %907 = vmatpush1.msra.mxu0 %v800
  %908 = vmatprep.subr.mxu0 0.0
  %909 = vmatpush1.msra.mxu0 %v801
  %910 = vmatprep.subr.mxu0 0.0
  %911 = vmatpush1.msra.mxu0 0.0
  %912 = vmatprep.subr.mxu0 0.0
  %913 = vmatpush1.msra.mxu0 0.0
  %914 = vmatprep.subr.mxu0 0.0
  %915 = vmatpush1.msra.mxu0 0.0
  %916 = vmatprep.subr.mxu0 0.0
  %917 = vmatpush1.msra.mxu0 0.0
  %918 = vmatprep.subr.mxu0 0.0
  %919 = vmatpush1.msra.mxu0 0.0
  %920 = vmatprep.subr.mxu0 0.0
  %921 = vmatpush1.msra.mxu0 0.0
  %922 = vmatprep.subr.mxu0 0.0
  %923 = vmatpush1.msra.mxu0 0.0
  %924 = vmatprep.subr.mxu0 0.0
  %925 = vmatpush1.msra.mxu0 0.0
  %926 = vmatprep.subr.mxu0 0.0
  %927 = vmatpush1.msra.mxu0 0.0
  %928 = vmatprep.subr.mxu0 0.0
  %929 = vmatpush1.msra.mxu0 0.0
  %930 = vmatprep.subr.mxu0 0.0
  %931 = vmatpush1.msra.mxu0 0.0
  %932 = vmatprep.subr.mxu0 0.0
  %933 = vmatpush1.msra.mxu0 0.0
  %934 = vmatprep.subr.mxu0 0.0
  %935 = vmatpush1.msra.mxu0 0.0
  %936 = vmatprep.subr.mxu0 0.0
  %937 = vmatpush1.msra.mxu0 0.0
  %938 = vmatprep.subr.mxu0 0.0
  %939 = vmatpush1.msra.mxu0 0.0
  %940 = vmatprep.subr.mxu0 0.0
  %941 = vmatpush1.msra.mxu0 0.0
  %942 = vmatprep.subr.mxu0 0.0
  %943 = vmatpush1.msra.mxu0 0.0
  %944 = vmatprep.subr.mxu0 0.0
  %945 = vmatpush1.msra.mxu0 0.0
  %946 = vmatprep.subr.mxu0 0.0
  %947 = vmatpush1.msra.mxu0 0.0
  %948 = vmatprep.subr.mxu0 0.0
  %949 = vmatpush1.msra.mxu0 0.0
  %950 = vmatprep.subr.mxu0 0.0
  %951 = vmatpush1.msra.mxu0 0.0
  %952 = vmatprep.subr.mxu0 0.0
  %953 = vmatpush1.msra.mxu0 0.0
  %954 = vmatprep.subr.mxu0 0.0
  %955 = vmatpush1.msra.mxu0 0.0
  %956 = vmatprep.subr.mxu0 0.0
  %957 = vmatpush1.msra.mxu0 0.0
  %958 = vmatprep.subr.mxu0 0.0
  %959 = vmatpush1.msra.mxu0 0.0
  %960 = vmatprep.subr.mxu0 0.0
  %961 = vmatpush1.msra.mxu0 0.0
  %962 = vmatprep.subr.mxu0 0.0
  %963 = vmatpush1.msra.mxu0 0.0
  %964 = vmatprep.subr.mxu0 0.0
  %965 = vmatpush1.msra.mxu0 0.0
  %966 = vmatprep.subr.mxu0 0.0
  %967 = vmatpush1.msra.mxu0 0.0
  %968 = vmatprep.subr.mxu0 0.0
  %969 = vmatpush1.msra.mxu0 0.0
  %970 = vmatprep.mubr.f32.mxu0 0.0
  %971 = vmatmul.mubr.f32.gmra.mrb[0].mxu0 %v811
  %v972 = vpop.f32.mrb[0].mxu0
  %v973 = vadd.f32 %v807, %v972
  %v974 = vpop.f32.mrb[0].mxu0
  %975 = vmatprep.mubr.f32.mxu0 0.0
  %976 = vmatmul.mubr.f32.gmra.mrb[0].mxu0 %v814
  %v977 = vpop.f32.mrb[0].mxu0
  %v978 = vadd.f32 %v807, %v977
  %v979 = vpop.f32.mrb[0].mxu0
  %980 = vmatprep.mubr.f32.mxu0 0.0
  %981 = vmatmul.mubr.f32.gmra.mrb[0].mxu0 %v817
  %v982 = vpop.f32.mrb[0].mxu0
  %v983 = vadd.f32 %v807, %v982
  %v984 = vpop.f32.mrb[0].mxu0
  %985 = vmatprep.mubr.f32.mxu0 0.0
  %986 = vmatmul.mubr.f32.gmra.mrb[0].mxu0 %v820
  %v987 = vpop.f32.mrb[0].mxu0
  %v988 = vadd.f32 %v807, %v987
  %v989 = vpop.f32.mrb[0].mxu0
  %990 = vmatprep.mubr.f32.mxu0 0.0
  %991 = vmatmul.mubr.f32.gmra.mrb[0].mxu0 %v823
  %v992 = vpop.f32.mrb[0].mxu0
  %v993 = vadd.f32 %v807, %v992
  %v994 = vpop.f32.mrb[0].mxu0
  %995 = vmatprep.mubr.f32.mxu0 0.0
  %996 = vmatmul.mubr.f32.gmra.mrb[0].mxu0 %v826
  %v997 = vpop.f32.mrb[0].mxu0
  %v998 = vadd.f32 %v807, %v997
  %v999 = vpop.f32.mrb[0].mxu0
  %1000 = vmatprep.mubr.f32.mxu0 0.0
  %1001 = vmatmul.mubr.f32.gmra.mrb[0].mxu0 %v829
  %v1002 = vpop.f32.mrb[0].mxu0
  %v1003 = vadd.f32 %v807, %v1002
  %v1004 = vpop.f32.mrb[0].mxu0
  %1005 = vmatprep.mubr.f32.mxu0 0.0
  %1006 = vmatmul.mubr.f32.gmra.mrb[0].mxu0 %v832
  %v1007 = vpop.f32.mrb[0].mxu0
  %v1008 = vadd.f32 %v807, %v1007
  %v1009 = vpop.f32.mrb[0].mxu0
  %1010 = vmatprep.mubr.f32.mxu0 0.0
  %1011 = vmatmul.mubr.f32.gmra.mrb[0].mxu0 %v835
  %v1012 = vpop.f32.mrb[0].mxu0
  %v1013 = vadd.f32 %v807, %v1012
  %v1014 = vpop.f32.mrb[0].mxu0
  %1015 = vmatprep.mubr.f32.mxu0 0.0
  %1016 = vmatmul.mubr.f32.gmra.mrb[0].mxu0 %v838
  %v1017 = vpop.f32.mrb[0].mxu0
  %v1018 = vadd.f32 %v807, %v1017
  %v1019 = vpop.f32.mrb[0].mxu0
  %1020 = vmatprep.mubr.f32.mxu0 0.0
  %1021 = vmatmul.mubr.f32.gmra.mrb[0].mxu0 %v841
  %v1022 = vpop.f32.mrb[0].mxu0
  %v1023 = vadd.f32 %v807, %v1022
  %v1024 = vpop.f32.mrb[0].mxu0
  %1025 = vmatprep.mubr.f32.mxu0 0.0
  %1026 = vmatmul.mubr.f32.gmra.mrb[0].mxu0 %v844
  %v1027 = vpop.f32.mrb[0].mxu0
  %v1028 = vadd.f32 %v807, %v1027
  %v1029 = vpop.f32.mrb[0].mxu0
  %1030 = vmatprep.mubr.f32.mxu0 0.0
  %1031 = vmatmul.mubr.f32.gmra.mrb[0].mxu0 %v847
  %v1032 = vpop.f32.mrb[0].mxu0
  %v1033 = vadd.f32 %v807, %v1032
  %v1034 = vpop.f32.mrb[0].mxu0
  %1035 = vmatprep.mubr.f32.mxu0 0.0
  %1036 = vmatmul.mubr.f32.gmra.mrb[0].mxu0 %v850
  %v1037 = vpop.f32.mrb[0].mxu0
  %v1038 = vadd.f32 %v807, %v1037
  %v1039 = vpop.f32.mrb[0].mxu0
  %1040 = vmatprep.mubr.f32.mxu0 0.0
  %1041 = vmatmul.mubr.f32.gmra.mrb[0].mxu0 %v853
  %v1042 = vpop.f32.mrb[0].mxu0
  %v1043 = vadd.f32 %v807, %v1042
  %v1044 = vpop.f32.mrb[0].mxu0
  %1045 = vmatprep.mubr.f32.mxu0 0.0
  %1046 = vmatmul.mubr.f32.gmra.mrb[0].mxu0 %v856
  %v1047 = vpop.f32.mrb[0].mxu0
  %v1048 = vadd.f32 %v807, %v1047
  %v1049 = vpop.f32.mrb[0].mxu0
  %1050 = vmatprep.mubr.f32.mxu0 0.0
  %1051 = vmatmul.mubr.f32.gmra.mrb[0].mxu0 %v859
  %v1052 = vpop.f32.mrb[0].mxu0
  %v1053 = vadd.f32 %v807, %v1052
  %v1054 = vpop.f32.mrb[0].mxu0
  %1055 = vmatprep.mubr.f32.mxu0 0.0
  %1056 = vmatmul.mubr.f32.gmra.mrb[0].mxu0 %v862
  %v1057 = vpop.f32.mrb[0].mxu0
  %v1058 = vadd.f32 %v807, %v1057
  %v1059 = vpop.f32.mrb[0].mxu0
  %1060 = vmatprep.mubr.f32.mxu0 0.0
  %1061 = vmatmul.mubr.f32.gmra.mrb[0].mxu0 %v865
  %v1062 = vpop.f32.mrb[0].mxu0
  %v1063 = vadd.f32 %v807, %v1062
  %v1064 = vpop.f32.mrb[0].mxu0
  %1065 = vmatprep.mubr.f32.mxu0 0.0
  %1066 = vmatmul.mubr.f32.gmra.mrb[0].mxu0 %v868
  %v1067 = vpop.f32.mrb[0].mxu0
  %v1068 = vadd.f32 %v807, %v1067
  %v1069 = vpop.f32.mrb[0].mxu0
  %1070 = vmatprep.mubr.f32.mxu0 0.0
  %1071 = vmatmul.mubr.f32.gmra.mrb[0].mxu0 %v871
  %v1072 = vpop.f32.mrb[0].mxu0
  %v1073 = vadd.f32 %v807, %v1072
  %v1074 = vpop.f32.mrb[0].mxu0
  %1075 = vmatprep.mubr.f32.mxu0 0.0
  %1076 = vmatmul.mubr.f32.gmra.mrb[0].mxu0 %v874
  %v1077 = vpop.f32.mrb[0].mxu0
  %v1078 = vadd.f32 %v807, %v1077
  %v1079 = vpop.f32.mrb[0].mxu0
  %1080 = vmatprep.mubr.f32.mxu0 0.0
  %1081 = vmatmul.mubr.f32.gmra.mrb[0].mxu0 %v877
  %v1082 = vpop.f32.mrb[0].mxu0
  %v1083 = vadd.f32 %v807, %v1082
  %v1084 = vpop.f32.mrb[0].mxu0
  %1085 = vmatprep.mubr.f32.mxu0 0.0
  %1086 = vmatmul.mubr.f32.gmra.mrb[0].mxu0 %v880
  %v1087 = vpop.f32.mrb[0].mxu0
  %v1088 = vadd.f32 %v807, %v1087
  %v1089 = vpop.f32.mrb[0].mxu0
  %1090 = vmatprep.mubr.f32.mxu0 0.0
  %1091 = vmatmul.mubr.f32.gmra.mrb[0].mxu0 %v883
  %v1092 = vpop.f32.mrb[0].mxu0
  %v1093 = vadd.f32 %v807, %v1092
  %v1094 = vpop.f32.mrb[0].mxu0
  %1095 = vmatprep.mubr.f32.mxu0 0.0
  %1096 = vmatmul.mubr.f32.gmra.mrb[0].mxu0 %v886
  %v1097 = vpop.f32.mrb[0].mxu0
  %v1098 = vadd.f32 %v807, %v1097
  %v1099 = vpop.f32.mrb[0].mxu0
  %1100 = vmatprep.mubr.f32.mxu0 0.0
  %1101 = vmatmul.mubr.f32.gmra.mrb[0].mxu0 %v889
  %v1102 = vpop.f32.mrb[0].mxu0
  %v1103 = vadd.f32 %v807, %v1102
  %v1104 = vpop.f32.mrb[0].mxu0
  %1105 = vmatprep.mubr.f32.mxu0 0.0
  %1106 = vmatmul.mubr.f32.gmra.mrb[0].mxu0 %v892
  %v1107 = vpop.f32.mrb[0].mxu0
  %v1108 = vadd.f32 %v807, %v1107
  %v1109 = vpop.f32.mrb[0].mxu0
  %1110 = vmatprep.mubr.f32.mxu0 0.0
  %1111 = vmatmul.mubr.f32.gmra.mrb[0].mxu0 %v895
  %v1112 = vpop.f32.mrb[0].mxu0
  %v1113 = vadd.f32 %v807, %v1112
  %v1114 = vpop.f32.mrb[0].mxu0
  %1115 = vmatprep.mubr.f32.mxu0 0.0
  %1116 = vmatmul.mubr.f32.gmra.mrb[0].mxu0 %v898
  %v1117 = vpop.f32.mrb[0].mxu0
  %v1118 = vadd.f32 %v807, %v1117
  %v1119 = vpop.f32.mrb[0].mxu0
  %1120 = vmatprep.mubr.f32.mxu0 0.0
  %1121 = vmatmul.mubr.f32.gmra.mrb[0].mxu0 %v901
  %v1122 = vpop.f32.mrb[0].mxu0
  %v1123 = vadd.f32 %v807, %v1122
  %v1124 = vpop.f32.mrb[0].mxu0
  %1125 = vmatprep.mubr.f32.mxu0 0.0
  %1126 = vmatmul.mubr.f32.gmra.mrb[0].mxu0 %v904
  %v1127 = vpop.f32.mrb[0].mxu0
  %v1128 = vadd.f32 %v807, %v1127
  %v1129 = vpop.f32.mrb[0].mxu0
  %1130 = vdwg.mxu0
  %v1131 = vpack.c.bf16 %v978, %v973
  %v1132 = vpack.c.bf16 %v988, %v983
  %v1133 = vpack.c.bf16 %v998, %v993
  %v1134 = vpack.c.bf16 %v1008, %v1003
  %v1135 = vpack.c.bf16 %v1018, %v1013
  %v1136 = vpack.c.bf16 %v1028, %v1023
  %v1137 = vpack.c.bf16 %v1038, %v1033
  %v1138 = vpack.c.bf16 %v1048, %v1043
  %v1139 = vpack.c.bf16 %v1058, %v1053
  %v1140 = vpack.c.bf16 %v1068, %v1063
  %v1141 = vpack.c.bf16 %v1078, %v1073
  %v1142 = vpack.c.bf16 %v1088, %v1083
  %v1143 = vpack.c.bf16 %v1098, %v1093
  %v1144 = vpack.c.bf16 %v1108, %v1103
  %v1145 = vpack.c.bf16 %v1118, %v1113
  %v1146 = vpack.c.bf16 %v1128, %v1123
  %1147 = vmatprep.subr.bf16.mxu0 0
  %1148 = vmatpush1.bf16.msra.mxu0 %v1131
  %1149 = vmatprep.subr.bf16.mxu0 0
  %1150 = vmatpush1.bf16.msra.mxu0 %v1132
  %1151 = vmatprep.subr.bf16.mxu0 0
  %1152 = vmatpush1.bf16.msra.mxu0 %v1133
  %1153 = vmatprep.subr.bf16.mxu0 0
  %1154 = vmatpush1.bf16.msra.mxu0 %v1134
  %1155 = vmatprep.subr.bf16.mxu0 0
  %1156 = vmatpush1.bf16.msra.mxu0 %v1135
  %1157 = vmatprep.subr.bf16.mxu0 0
  %1158 = vmatpush1.bf16.msra.mxu0 %v1136
  %1159 = vmatprep.subr.bf16.mxu0 0
  %1160 = vmatpush1.bf16.msra.mxu0 %v1137
  %1161 = vmatprep.subr.bf16.mxu0 0
  %1162 = vmatpush1.bf16.msra.mxu0 %v1138
  %1163 = vmatprep.subr.bf16.mxu0 0
  %1164 = vmatpush1.bf16.msra.mxu0 %v1139
  %1165 = vmatprep.subr.bf16.mxu0 0
  %1166 = vmatpush1.bf16.msra.mxu0 %v1140
  %1167 = vmatprep.subr.bf16.mxu0 0
  %1168 = vmatpush1.bf16.msra.mxu0 %v1141
  %1169 = vmatprep.subr.bf16.mxu0 0
  %1170 = vmatpush1.bf16.msra.mxu0 %v1142
  %1171 = vmatprep.subr.bf16.mxu0 0
  %1172 = vmatpush1.bf16.msra.mxu0 %v1143
  %1173 = vmatprep.subr.bf16.mxu0 0
  %1174 = vmatpush1.bf16.msra.mxu0 %v1144
  %1175 = vmatprep.subr.bf16.mxu0 0
  %1176 = vmatpush1.bf16.msra.mxu0 %v1145
  %1177 = vmatprep.subr.bf16.mxu0 0
  %1178 = vmatpush1.bf16.msra.mxu0 %v1146
  %1179 = vmatprep.mubr.bf16.mxu0 %v544
  %1180 = vmatmul.mubr.bf16.gmra.mrb[0].mxu0 %v543
  %v1181 = vpop.f32.mrb[0].mxu0
  %v1182 = vadd.f32 0.0, %v1181
  %v1183 = vpop.f32.mrb[0].mxu0
  %v1184 = vpop.f32.mrb[0].mxu0
  %v1185 = vadd.f32 0.0, %v1184
  %v1186 = vpop.f32.mrb[0].mxu0
  %1187 = vmatprep.mubr.bf16.mxu0 %v546
  %1188 = vmatmul.mubr.bf16.gmra.mrb[0].mxu0 %v545
  %v1189 = vpop.f32.mrb[0].mxu0
  %v1190 = vadd.f32 0.0, %v1189
  %v1191 = vpop.f32.mrb[0].mxu0
  %v1192 = vpop.f32.mrb[0].mxu0
  %v1193 = vadd.f32 0.0, %v1192
  %v1194 = vpop.f32.mrb[0].mxu0
  %1195 = vmatprep.mubr.bf16.mxu0 %v548
  %1196 = vmatmul.mubr.bf16.gmra.mrb[0].mxu0 %v547
  %v1197 = vpop.f32.mrb[0].mxu0
  %v1198 = vadd.f32 0.0, %v1197
  %v1199 = vpop.f32.mrb[0].mxu0
  %v1200 = vpop.f32.mrb[0].mxu0
  %v1201 = vadd.f32 0.0, %v1200
  %v1202 = vpop.f32.mrb[0].mxu0
  %1203 = vmatprep.mubr.bf16.mxu0 %v550
  %1204 = vmatmul.mubr.bf16.gmra.mrb[0].mxu0 %v549
  %v1205 = vpop.f32.mrb[0].mxu0
  %v1206 = vadd.f32 0.0, %v1205
  %v1207 = vpop.f32.mrb[0].mxu0
  %v1208 = vpop.f32.mrb[0].mxu0
  %v1209 = vadd.f32 0.0, %v1208
  %v1210 = vpop.f32.mrb[0].mxu0
  %1211 = vmatprep.mubr.bf16.mxu0 %v552
  %1212 = vmatmul.mubr.bf16.gmra.mrb[0].mxu0 %v551
  %v1213 = vpop.f32.mrb[0].mxu0
  %v1214 = vadd.f32 0.0, %v1213
  %v1215 = vpop.f32.mrb[0].mxu0
  %v1216 = vpop.f32.mrb[0].mxu0
  %v1217 = vadd.f32 0.0, %v1216
  %v1218 = vpop.f32.mrb[0].mxu0
  %1219 = vmatprep.mubr.bf16.mxu0 %v554
  %1220 = vmatmul.mubr.bf16.gmra.mrb[0].mxu0 %v553
  %v1221 = vpop.f32.mrb[0].mxu0
  %v1222 = vadd.f32 0.0, %v1221
  %v1223 = vpop.f32.mrb[0].mxu0
  %v1224 = vpop.f32.mrb[0].mxu0
  %v1225 = vadd.f32 0.0, %v1224
  %v1226 = vpop.f32.mrb[0].mxu0
  %1227 = vmatprep.mubr.bf16.mxu0 %v556
  %1228 = vmatmul.mubr.bf16.gmra.mrb[0].mxu0 %v555
  %v1229 = vpop.f32.mrb[0].mxu0
  %v1230 = vadd.f32 0.0, %v1229
  %v1231 = vpop.f32.mrb[0].mxu0
  %v1232 = vpop.f32.mrb[0].mxu0
  %v1233 = vadd.f32 0.0, %v1232
  %v1234 = vpop.f32.mrb[0].mxu0
  %1235 = vmatprep.mubr.bf16.mxu0 %v558
  %1236 = vmatmul.mubr.bf16.gmra.mrb[0].mxu0 %v557
  %v1237 = vpop.f32.mrb[0].mxu0
  %v1238 = vadd.f32 0.0, %v1237
  %v1239 = vpop.f32.mrb[0].mxu0
  %v1240 = vpop.f32.mrb[0].mxu0
  %v1241 = vadd.f32 0.0, %v1240
  %v1242 = vpop.f32.mrb[0].mxu0
  %1243 = vmatprep.mubr.bf16.mxu0 %v560
  %1244 = vmatmul.mubr.bf16.gmra.mrb[0].mxu0 %v559
  %v1245 = vpop.f32.mrb[0].mxu0
  %v1246 = vadd.f32 0.0, %v1245
  %v1247 = vpop.f32.mrb[0].mxu0
  %v1248 = vpop.f32.mrb[0].mxu0
  %v1249 = vadd.f32 0.0, %v1248
  %v1250 = vpop.f32.mrb[0].mxu0
  %1251 = vmatprep.mubr.bf16.mxu0 %v562
  %1252 = vmatmul.mubr.bf16.gmra.mrb[0].mxu0 %v561
  %v1253 = vpop.f32.mrb[0].mxu0
  %v1254 = vadd.f32 0.0, %v1253
  %v1255 = vpop.f32.mrb[0].mxu0
  %v1256 = vpop.f32.mrb[0].mxu0
  %v1257 = vadd.f32 0.0, %v1256
  %v1258 = vpop.f32.mrb[0].mxu0
  %1259 = vmatprep.mubr.bf16.mxu0 %v564
  %1260 = vmatmul.mubr.bf16.gmra.mrb[0].mxu0 %v563
  %v1261 = vpop.f32.mrb[0].mxu0
  %v1262 = vadd.f32 0.0, %v1261
  %v1263 = vpop.f32.mrb[0].mxu0
  %v1264 = vpop.f32.mrb[0].mxu0
  %v1265 = vadd.f32 0.0, %v1264
  %v1266 = vpop.f32.mrb[0].mxu0
  %1267 = vmatprep.mubr.bf16.mxu0 %v566
  %1268 = vmatmul.mubr.bf16.gmra.mrb[0].mxu0 %v565
  %v1269 = vpop.f32.mrb[0].mxu0
  %v1270 = vadd.f32 0.0, %v1269
  %v1271 = vpop.f32.mrb[0].mxu0
  %v1272 = vpop.f32.mrb[0].mxu0
  %v1273 = vadd.f32 0.0, %v1272
  %v1274 = vpop.f32.mrb[0].mxu0
  %1275 = vmatprep.mubr.bf16.mxu0 %v568
  %1276 = vmatmul.mubr.bf16.gmra.mrb[0].mxu0 %v567
  %v1277 = vpop.f32.mrb[0].mxu0
  %v1278 = vadd.f32 0.0, %v1277
  %v1279 = vpop.f32.mrb[0].mxu0
  %v1280 = vpop.f32.mrb[0].mxu0
  %v1281 = vadd.f32 0.0, %v1280
  %v1282 = vpop.f32.mrb[0].mxu0
  %1283 = vmatprep.mubr.bf16.mxu0 %v570
  %1284 = vmatmul.mubr.bf16.gmra.mrb[0].mxu0 %v569
  %v1285 = vpop.f32.mrb[0].mxu0
  %v1286 = vadd.f32 0.0, %v1285
  %v1287 = vpop.f32.mrb[0].mxu0
  %v1288 = vpop.f32.mrb[0].mxu0
  %v1289 = vadd.f32 0.0, %v1288
  %v1290 = vpop.f32.mrb[0].mxu0
  %1291 = vmatprep.mubr.bf16.mxu0 %v572
  %1292 = vmatmul.mubr.bf16.gmra.mrb[0].mxu0 %v571
  %v1293 = vpop.f32.mrb[0].mxu0
  %v1294 = vadd.f32 0.0, %v1293
  %v1295 = vpop.f32.mrb[0].mxu0
  %v1296 = vpop.f32.mrb[0].mxu0
  %v1297 = vadd.f32 0.0, %v1296
  %v1298 = vpop.f32.mrb[0].mxu0
  %1299 = vmatprep.mubr.bf16.mxu0 %v574
  %1300 = vmatmul.mubr.bf16.gmra.mrb[0].mxu0 %v573
  %v1301 = vpop.f32.mrb[0].mxu0
  %v1302 = vadd.f32 0.0, %v1301
  %v1303 = vpop.f32.mrb[0].mxu0
  %v1304 = vpop.f32.mrb[0].mxu0
  %v1305 = vadd.f32 0.0, %v1304
  %v1306 = vpop.f32.mrb[0].mxu0
  %1307 = vdwg.mxu0
  %v1308 = vmax.f32 %v1182, 0.0
  %v1309 = vmax.f32 %v1185, 0.0
  %v1310 = vmax.f32 %v1190, 0.0
  %v1311 = vmax.f32 %v1193, 0.0
  %v1312 = vmax.f32 %v1198, 0.0
  %v1313 = vmax.f32 %v1201, 0.0
  %v1314 = vmax.f32 %v1206, 0.0
  %v1315 = vmax.f32 %v1209, 0.0
  %v1316 = vmax.f32 %v1214, 0.0
  %v1317 = vmax.f32 %v1217, 0.0
  %v1318 = vmax.f32 %v1222, 0.0
  %v1319 = vmax.f32 %v1225, 0.0
  %v1320 = vmax.f32 %v1230, 0.0
  %v1321 = vmax.f32 %v1233, 0.0
  %v1322 = vmax.f32 %v1238, 0.0
  %v1323 = vmax.f32 %v1241, 0.0
  %v1324 = vmax.f32 %v1246, 0.0
  %v1325 = vmax.f32 %v1249, 0.0
  %v1326 = vmax.f32 %v1254, 0.0
  %v1327 = vmax.f32 %v1257, 0.0
  %v1328 = vmax.f32 %v1262, 0.0
  %v1329 = vmax.f32 %v1265, 0.0
  %v1330 = vmax.f32 %v1270, 0.0
  %v1331 = vmax.f32 %v1273, 0.0
  %v1332 = vmax.f32 %v1278, 0.0
  %v1333 = vmax.f32 %v1281, 0.0
  %v1334 = vmax.f32 %v1286, 0.0
  %v1335 = vmax.f32 %v1289, 0.0
  %v1336 = vmax.f32 %v1294, 0.0
  %v1337 = vmax.f32 %v1297, 0.0
  %v1338 = vmax.f32 %v1302, 0.0
  %v1339 = vmax.f32 %v1305, 0.0
  %v1340 = vld [vmem:[%s6] sm:$0x1]
  %v1342 = vlaneseq
  %v1343 = vshrl.u32 %v1342, 7
  %v1344 = vsub.s32 0, %v1343
  %v1345 = vrot.slane %v1340, %v1344
  %v1347 = vmul.f32 %v1308, %v1345
  %v1348 = vmul.f32 %v1309, %v1345
  %v1349 = vmul.f32 %v1310, %v1345
  %v1350 = vmul.f32 %v1311, %v1345
  %v1351 = vmul.f32 %v1312, %v1345
  %v1352 = vmul.f32 %v1313, %v1345
  %v1353 = vmul.f32 %v1314, %v1345
  %v1354 = vmul.f32 %v1315, %v1345
  %v1355 = vmul.f32 %v1316, %v1345
  %v1356 = vmul.f32 %v1317, %v1345
  %v1357 = vmul.f32 %v1318, %v1345
  %v1358 = vmul.f32 %v1319, %v1345
  %v1359 = vmul.f32 %v1320, %v1345
  %v1360 = vmul.f32 %v1321, %v1345
  %v1361 = vmul.f32 %v1322, %v1345
  %v1362 = vmul.f32 %v1323, %v1345
  %v1363 = vmul.f32 %v1324, %v1345
  %v1364 = vmul.f32 %v1325, %v1345
  %v1365 = vmul.f32 %v1326, %v1345
  %v1366 = vmul.f32 %v1327, %v1345
  %v1367 = vmul.f32 %v1328, %v1345
  %v1368 = vmul.f32 %v1329, %v1345
  %v1369 = vmul.f32 %v1330, %v1345
  %v1370 = vmul.f32 %v1331, %v1345
  %v1371 = vmul.f32 %v1332, %v1345
  %v1372 = vmul.f32 %v1333, %v1345
  %v1373 = vmul.f32 %v1334, %v1345
  %v1374 = vmul.f32 %v1335, %v1345
  %v1375 = vmul.f32 %v1336, %v1345
  %v1376 = vmul.f32 %v1337, %v1345
  %v1377 = vmul.f32 %v1338, %v1345
  %v1378 = vmul.f32 %v1339, %v1345
  %vm1379 = vcmask 261120
  %v1380 = vsel %vm1379, %v1347, 0.0
  %1381 = vadd.xlane.f32.xlu0 %v1380
  %v1382 = vpop.xlane.xlu0 %1381
  %v1383 = vsel %vm1379, %v1348, 0.0
  %1384 = vadd.xlane.f32.xlu0 %v1383
  %v1385 = vpop.xlane.xlu0 %1384
  %v1386 = vsel %vm1379, %v1349, 0.0
  %1387 = vadd.xlane.f32.xlu0 %v1386
  %v1388 = vpop.xlane.xlu0 %1387
  %v1389 = vsel %vm1379, %v1350, 0.0
  %1390 = vadd.xlane.f32.xlu0 %v1389
  %v1391 = vpop.xlane.xlu0 %1390
  %v1392 = vsel %vm1379, %v1351, 0.0
  %1393 = vadd.xlane.f32.xlu0 %v1392
  %v1394 = vpop.xlane.xlu0 %1393
  %v1395 = vsel %vm1379, %v1352, 0.0
  %1396 = vadd.xlane.f32.xlu0 %v1395
  %v1397 = vpop.xlane.xlu0 %1396
  %v1398 = vsel %vm1379, %v1353, 0.0
  %1399 = vadd.xlane.f32.xlu0 %v1398
  %v1400 = vpop.xlane.xlu0 %1399
  %v1401 = vsel %vm1379, %v1354, 0.0
  %1402 = vadd.xlane.f32.xlu0 %v1401
  %v1403 = vpop.xlane.xlu0 %1402
  %v1404 = vsel %vm1379, %v1355, 0.0
  %1405 = vadd.xlane.f32.xlu0 %v1404
  %v1406 = vpop.xlane.xlu0 %1405
  %v1407 = vsel %vm1379, %v1356, 0.0
  %1408 = vadd.xlane.f32.xlu0 %v1407
  %v1409 = vpop.xlane.xlu0 %1408
  %v1410 = vsel %vm1379, %v1357, 0.0
  %1411 = vadd.xlane.f32.xlu0 %v1410
  %v1412 = vpop.xlane.xlu0 %1411
  %v1413 = vsel %vm1379, %v1358, 0.0
  %1414 = vadd.xlane.f32.xlu0 %v1413
  %v1415 = vpop.xlane.xlu0 %1414
  %v1416 = vsel %vm1379, %v1359, 0.0
  %1417 = vadd.xlane.f32.xlu0 %v1416
  %v1418 = vpop.xlane.xlu0 %1417
  %v1419 = vsel %vm1379, %v1360, 0.0
  %1420 = vadd.xlane.f32.xlu0 %v1419
  %v1421 = vpop.xlane.xlu0 %1420
  %v1422 = vsel %vm1379, %v1361, 0.0
  %1423 = vadd.xlane.f32.xlu0 %v1422
  %v1424 = vpop.xlane.xlu0 %1423
  %v1425 = vsel %vm1379, %v1362, 0.0
  %1426 = vadd.xlane.f32.xlu0 %v1425
  %v1427 = vpop.xlane.xlu0 %1426
  %v1428 = vsel %vm1379, %v1363, 0.0
  %1429 = vadd.xlane.f32.xlu0 %v1428
  %v1430 = vpop.xlane.xlu0 %1429
  %v1431 = vsel %vm1379, %v1364, 0.0
  %1432 = vadd.xlane.f32.xlu0 %v1431
  %v1433 = vpop.xlane.xlu0 %1432
  %v1434 = vsel %vm1379, %v1365, 0.0
  %1435 = vadd.xlane.f32.xlu0 %v1434
  %v1436 = vpop.xlane.xlu0 %1435
  %v1437 = vsel %vm1379, %v1366, 0.0
  %1438 = vadd.xlane.f32.xlu0 %v1437
  %v1439 = vpop.xlane.xlu0 %1438
  %v1440 = vsel %vm1379, %v1367, 0.0
  %1441 = vadd.xlane.f32.xlu0 %v1440
  %v1442 = vpop.xlane.xlu0 %1441
  %v1443 = vsel %vm1379, %v1368, 0.0
  %1444 = vadd.xlane.f32.xlu0 %v1443
  %v1445 = vpop.xlane.xlu0 %1444
  %v1446 = vsel %vm1379, %v1369, 0.0
  %1447 = vadd.xlane.f32.xlu0 %v1446
  %v1448 = vpop.xlane.xlu0 %1447
  %v1449 = vsel %vm1379, %v1370, 0.0
  %1450 = vadd.xlane.f32.xlu0 %v1449
  %v1451 = vpop.xlane.xlu0 %1450
  %v1452 = vsel %vm1379, %v1371, 0.0
  %1453 = vadd.xlane.f32.xlu0 %v1452
  %v1454 = vpop.xlane.xlu0 %1453
  %v1455 = vsel %vm1379, %v1372, 0.0
  %1456 = vadd.xlane.f32.xlu0 %v1455
  %v1457 = vpop.xlane.xlu0 %1456
  %v1458 = vsel %vm1379, %v1373, 0.0
  %1459 = vadd.xlane.f32.xlu0 %v1458
  %v1460 = vpop.xlane.xlu0 %1459
  %v1461 = vsel %vm1379, %v1374, 0.0
  %1462 = vadd.xlane.f32.xlu0 %v1461
  %v1463 = vpop.xlane.xlu0 %1462
  %v1464 = vsel %vm1379, %v1375, 0.0
  %1465 = vadd.xlane.f32.xlu0 %v1464
  %v1466 = vpop.xlane.xlu0 %1465
  %v1467 = vsel %vm1379, %v1376, 0.0
  %1468 = vadd.xlane.f32.xlu0 %v1467
  %v1469 = vpop.xlane.xlu0 %1468
  %v1470 = vsel %vm1379, %v1377, 0.0
  %1471 = vadd.xlane.f32.xlu0 %v1470
  %v1472 = vpop.xlane.xlu0 %1471
  %v1473 = vsel %vm1379, %v1378, 0.0
  %1474 = vadd.xlane.f32.xlu0 %v1473
  %v1475 = vpop.xlane.xlu0 %1474
  %v1476 = vld [vmem:[#allocation2] sm:$0x1]
  %v1478 = vlaneseq
  %v1479 = vshrl.u32 %v1478, 7
  %v1480 = vsub.s32 0, %v1479
  %v1481 = vrot.slane %v1476, %v1480
  %v1483 = vadd.f32 %v1382, %v1481
  %v1484 = vadd.f32 %v1385, %v1481
  %v1485 = vadd.f32 %v1388, %v1481
  %v1486 = vadd.f32 %v1391, %v1481
  %v1487 = vadd.f32 %v1394, %v1481
  %v1488 = vadd.f32 %v1397, %v1481
  %v1489 = vadd.f32 %v1400, %v1481
  %v1490 = vadd.f32 %v1403, %v1481
  %v1491 = vadd.f32 %v1406, %v1481
  %v1492 = vadd.f32 %v1409, %v1481
  %v1493 = vadd.f32 %v1412, %v1481
  %v1494 = vadd.f32 %v1415, %v1481
  %v1495 = vadd.f32 %v1418, %v1481
  %v1496 = vadd.f32 %v1421, %v1481
  %v1497 = vadd.f32 %v1424, %v1481
  %v1498 = vadd.f32 %v1427, %v1481
  %v1499 = vadd.f32 %v1430, %v1481
  %v1500 = vadd.f32 %v1433, %v1481
  %v1501 = vadd.f32 %v1436, %v1481
  %v1502 = vadd.f32 %v1439, %v1481
  %v1503 = vadd.f32 %v1442, %v1481
  %v1504 = vadd.f32 %v1445, %v1481
  %v1505 = vadd.f32 %v1448, %v1481
  %v1506 = vadd.f32 %v1451, %v1481
  %v1507 = vadd.f32 %v1454, %v1481
  %v1508 = vadd.f32 %v1457, %v1481
  %v1509 = vadd.f32 %v1460, %v1481
  %v1510 = vadd.f32 %v1463, %v1481
  %v1511 = vadd.f32 %v1466, %v1481
  %v1512 = vadd.f32 %v1469, %v1481
  %v1513 = vadd.f32 %v1472, %v1481
  %v1514 = vadd.f32 %v1475, %v1481
  %v1515 = vxor.u32 %v1483, 2147483648
  %v1516 = vxor.u32 %v1484, 2147483648
  %v1517 = vxor.u32 %v1485, 2147483648
  %v1518 = vxor.u32 %v1486, 2147483648
  %v1519 = vxor.u32 %v1487, 2147483648
  %v1520 = vxor.u32 %v1488, 2147483648
  %v1521 = vxor.u32 %v1489, 2147483648
  %v1522 = vxor.u32 %v1490, 2147483648
  %v1523 = vxor.u32 %v1491, 2147483648
  %v1524 = vxor.u32 %v1492, 2147483648
  %v1525 = vxor.u32 %v1493, 2147483648
  %v1526 = vxor.u32 %v1494, 2147483648
  %v1527 = vxor.u32 %v1495, 2147483648
  %v1528 = vxor.u32 %v1496, 2147483648
  %v1529 = vxor.u32 %v1497, 2147483648
  %v1530 = vxor.u32 %v1498, 2147483648
  %v1531 = vxor.u32 %v1499, 2147483648
  %v1532 = vxor.u32 %v1500, 2147483648
  %v1533 = vxor.u32 %v1501, 2147483648
  %v1534 = vxor.u32 %v1502, 2147483648
  %v1535 = vxor.u32 %v1503, 2147483648
  %v1536 = vxor.u32 %v1504, 2147483648
  %v1537 = vxor.u32 %v1505, 2147483648
  %v1538 = vxor.u32 %v1506, 2147483648
  %v1539 = vxor.u32 %v1507, 2147483648
  %v1540 = vxor.u32 %v1508, 2147483648
  %v1541 = vxor.u32 %v1509, 2147483648
  %v1542 = vxor.u32 %v1510, 2147483648
  %v1543 = vxor.u32 %v1511, 2147483648
  %v1544 = vxor.u32 %v1512, 2147483648
  %v1545 = vxor.u32 %v1513, 2147483648
  %v1546 = vxor.u32 %v1514, 2147483648
  %v1547 = vmul.f32 %v1515, 1.442695
  %v1548 = vpow.pop %v1547
  %v1549 = vmul.f32 %v1516, 1.442695
  %v1550 = vpow.pop %v1549
  %v1551 = vmul.f32 %v1517, 1.442695
  %v1552 = vpow.pop %v1551
  %v1553 = vmul.f32 %v1518, 1.442695
  %v1554 = vpow.pop %v1553
  %v1555 = vmul.f32 %v1519, 1.442695
  %v1556 = vpow.pop %v1555
  %v1557 = vmul.f32 %v1520, 1.442695
  %v1558 = vpow.pop %v1557
  %v1559 = vmul.f32 %v1521, 1.442695
  %v1560 = vpow.pop %v1559
  %v1561 = vmul.f32 %v1522, 1.442695
  %v1562 = vpow.pop %v1561
  %v1563 = vmul.f32 %v1523, 1.442695
  %v1564 = vpow.pop %v1563
  %v1565 = vmul.f32 %v1524, 1.442695
  %v1566 = vpow.pop %v1565
  %v1567 = vmul.f32 %v1525, 1.442695
  %v1568 = vpow.pop %v1567
  %v1569 = vmul.f32 %v1526, 1.442695
  %v1570 = vpow.pop %v1569
  %v1571 = vmul.f32 %v1527, 1.442695
  %v1572 = vpow.pop %v1571
  %v1573 = vmul.f32 %v1528, 1.442695
  %v1574 = vpow.pop %v1573
  %v1575 = vmul.f32 %v1529, 1.442695
  %v1576 = vpow.pop %v1575
  %v1577 = vmul.f32 %v1530, 1.442695
  %v1578 = vpow.pop %v1577
  %v1579 = vmul.f32 %v1531, 1.442695
  %v1580 = vpow.pop %v1579
  %v1581 = vmul.f32 %v1532, 1.442695
  %v1582 = vpow.pop %v1581
  %v1583 = vmul.f32 %v1533, 1.442695
  %v1584 = vpow.pop %v1583
  %v1585 = vmul.f32 %v1534, 1.442695
  %v1586 = vpow.pop %v1585
  %v1587 = vmul.f32 %v1535, 1.442695
  %v1588 = vpow.pop %v1587
  %v1589 = vmul.f32 %v1536, 1.442695
  %v1590 = vpow.pop %v1589
  %v1591 = vmul.f32 %v1537, 1.442695
  %v1592 = vpow.pop %v1591
  %v1593 = vmul.f32 %v1538, 1.442695
  %v1594 = vpow.pop %v1593
  %v1595 = vmul.f32 %v1539, 1.442695
  %v1596 = vpow.pop %v1595
  %v1597 = vmul.f32 %v1540, 1.442695
  %v1598 = vpow.pop %v1597
  %v1599 = vmul.f32 %v1541, 1.442695
  %v1600 = vpow.pop %v1599
  %v1601 = vmul.f32 %v1542, 1.442695
  %v1602 = vpow.pop %v1601
  %v1603 = vmul.f32 %v1543, 1.442695
  %v1604 = vpow.pop %v1603
  %v1605 = vmul.f32 %v1544, 1.442695
  %v1606 = vpow.pop %v1605
  %v1607 = vmul.f32 %v1545, 1.442695
  %v1608 = vpow.pop %v1607
  %v1609 = vmul.f32 %v1546, 1.442695
  %v1610 = vpow.pop %v1609
  %v1611 = vadd.f32 %v1548, 1.0
  %v1612 = vadd.f32 %v1550, 1.0
  %v1613 = vadd.f32 %v1552, 1.0
  %v1614 = vadd.f32 %v1554, 1.0
  %v1615 = vadd.f32 %v1556, 1.0
  %v1616 = vadd.f32 %v1558, 1.0
  %v1617 = vadd.f32 %v1560, 1.0
  %v1618 = vadd.f32 %v1562, 1.0
  %v1619 = vadd.f32 %v1564, 1.0
  %v1620 = vadd.f32 %v1566, 1.0
  %v1621 = vadd.f32 %v1568, 1.0
  %v1622 = vadd.f32 %v1570, 1.0
  %v1623 = vadd.f32 %v1572, 1.0
  %v1624 = vadd.f32 %v1574, 1.0
  %v1625 = vadd.f32 %v1576, 1.0
  %v1626 = vadd.f32 %v1578, 1.0
  %v1627 = vadd.f32 %v1580, 1.0
  %v1628 = vadd.f32 %v1582, 1.0
  %v1629 = vadd.f32 %v1584, 1.0
  %v1630 = vadd.f32 %v1586, 1.0
  %v1631 = vadd.f32 %v1588, 1.0
  %v1632 = vadd.f32 %v1590, 1.0
  %v1633 = vadd.f32 %v1592, 1.0
  %v1634 = vadd.f32 %v1594, 1.0
  %v1635 = vadd.f32 %v1596, 1.0
  %v1636 = vadd.f32 %v1598, 1.0
  %v1637 = vadd.f32 %v1600, 1.0
  %v1638 = vadd.f32 %v1602, 1.0
  %v1639 = vadd.f32 %v1604, 1.0
  %v1640 = vadd.f32 %v1606, 1.0
  %v1641 = vadd.f32 %v1608, 1.0
  %v1642 = vadd.f32 %v1610, 1.0
  %v1643 = vrcp.pop %v1611
  %v1644 = vmul.f32 1.0, %v1643
  %v1645 = vrcp.pop %v1612
  %v1646 = vmul.f32 1.0, %v1645
  %v1647 = vrcp.pop %v1613
  %v1648 = vmul.f32 1.0, %v1647
  %v1649 = vrcp.pop %v1614
  %v1650 = vmul.f32 1.0, %v1649
  %v1651 = vrcp.pop %v1615
  %v1652 = vmul.f32 1.0, %v1651
  %v1653 = vrcp.pop %v1616
  %v1654 = vmul.f32 1.0, %v1653
  %v1655 = vrcp.pop %v1617
  %v1656 = vmul.f32 1.0, %v1655
  %v1657 = vrcp.pop %v1618
  %v1658 = vmul.f32 1.0, %v1657
  %v1659 = vrcp.pop %v1619
  %v1660 = vmul.f32 1.0, %v1659
  %v1661 = vrcp.pop %v1620
  %v1662 = vmul.f32 1.0, %v1661
  %v1663 = vrcp.pop %v1621
  %v1664 = vmul.f32 1.0, %v1663
  %v1665 = vrcp.pop %v1622
  %v1666 = vmul.f32 1.0, %v1665
  %v1667 = vrcp.pop %v1623
  %v1668 = vmul.f32 1.0, %v1667
  %v1669 = vrcp.pop %v1624
  %v1670 = vmul.f32 1.0, %v1669
  %v1671 = vrcp.pop %v1625
  %v1672 = vmul.f32 1.0, %v1671
  %v1673 = vrcp.pop %v1626
  %v1674 = vmul.f32 1.0, %v1673
  %v1675 = vrcp.pop %v1627
  %v1676 = vmul.f32 1.0, %v1675
  %v1677 = vrcp.pop %v1628
  %v1678 = vmul.f32 1.0, %v1677
  %v1679 = vrcp.pop %v1629
  %v1680 = vmul.f32 1.0, %v1679
  %v1681 = vrcp.pop %v1630
  %v1682 = vmul.f32 1.0, %v1681
  %v1683 = vrcp.pop %v1631
  %v1684 = vmul.f32 1.0, %v1683
  %v1685 = vrcp.pop %v1632
  %v1686 = vmul.f32 1.0, %v1685
  %v1687 = vrcp.pop %v1633
  %v1688 = vmul.f32 1.0, %v1687
  %v1689 = vrcp.pop %v1634
  %v1690 = vmul.f32 1.0, %v1689
  %v1691 = vrcp.pop %v1635
  %v1692 = vmul.f32 1.0, %v1691
  %v1693 = vrcp.pop %v1636
  %v1694 = vmul.f32 1.0, %v1693
  %v1695 = vrcp.pop %v1637
  %v1696 = vmul.f32 1.0, %v1695
  %v1697 = vrcp.pop %v1638
  %v1698 = vmul.f32 1.0, %v1697
  %v1699 = vrcp.pop %v1639
  %v1700 = vmul.f32 1.0, %v1699
  %v1701 = vrcp.pop %v1640
  %v1702 = vmul.f32 1.0, %v1701
  %v1703 = vrcp.pop %v1641
  %v1704 = vmul.f32 1.0, %v1703
  %v1705 = vrcp.pop %v1642
  %v1706 = vmul.f32 1.0, %v1705
  %vm1707 = vcmask 7168
  %1708 = vst.msk [vmem:[%s8] sm:$0xff] %vm1707, %v1644
  %1709 = vst.msk [vmem:[%s8 + $0x8] sm:$0xff] %vm1707, %v1646
  %1710 = vst.msk [vmem:[%s8 + $0x10] sm:$0xff] %vm1707, %v1648
  %1711 = vst.msk [vmem:[%s8 + $0x18] sm:$0xff] %vm1707, %v1650
  %1712 = vst.msk [vmem:[%s8 + $0x20] sm:$0xff] %vm1707, %v1652
  %1713 = vst.msk [vmem:[%s8 + $0x28] sm:$0xff] %vm1707, %v1654
  %1714 = vst.msk [vmem:[%s8 + $0x30] sm:$0xff] %vm1707, %v1656
  %1715 = vst.msk [vmem:[%s8 + $0x38] sm:$0xff] %vm1707, %v1658
  %1716 = vst.msk [vmem:[%s8 + $0x40] sm:$0xff] %vm1707, %v1660
  %1717 = vst.msk [vmem:[%s8 + $0x48] sm:$0xff] %vm1707, %v1662
  %1718 = vst.msk [vmem:[%s8 + $0x50] sm:$0xff] %vm1707, %v1664
  %1719 = vst.msk [vmem:[%s8 + $0x58] sm:$0xff] %vm1707, %v1666
  %1720 = vst.msk [vmem:[%s8 + $0x60] sm:$0xff] %vm1707, %v1668
  %1721 = vst.msk [vmem:[%s8 + $0x68] sm:$0xff] %vm1707, %v1670
  %1722 = vst.msk [vmem:[%s8 + $0x70] sm:$0xff] %vm1707, %v1672
  %1723 = vst.msk [vmem:[%s8 + $0x78] sm:$0xff] %vm1707, %v1674
  %1724 = vst.msk [vmem:[%s8 + $0x80] sm:$0xff] %vm1707, %v1676
  %1725 = vst.msk [vmem:[%s8 + $0x88] sm:$0xff] %vm1707, %v1678
  %1726 = vst.msk [vmem:[%s8 + $0x90] sm:$0xff] %vm1707, %v1680
  %1727 = vst.msk [vmem:[%s8 + $0x98] sm:$0xff] %vm1707, %v1682
  %1728 = vst.msk [vmem:[%s8 + $0xa0] sm:$0xff] %vm1707, %v1684
  %1729 = vst.msk [vmem:[%s8 + $0xa8] sm:$0xff] %vm1707, %v1686
  %1730 = vst.msk [vmem:[%s8 + $0xb0] sm:$0xff] %vm1707, %v1688
  %1731 = vst.msk [vmem:[%s8 + $0xb8] sm:$0xff] %vm1707, %v1690
  %1732 = vst.msk [vmem:[%s8 + $0xc0] sm:$0xff] %vm1707, %v1692
  %1733 = vst.msk [vmem:[%s8 + $0xc8] sm:$0xff] %vm1707, %v1694
  %1734 = vst.msk [vmem:[%s8 + $0xd0] sm:$0xff] %vm1707, %v1696
  %1735 = vst.msk [vmem:[%s8 + $0xd8] sm:$0xff] %vm1707, %v1698
  %1736 = vst.msk [vmem:[%s8 + $0xe0] sm:$0xff] %vm1707, %v1700
  %1737 = vst.msk [vmem:[%s8 + $0xe8] sm:$0xff] %vm1707, %v1702
  %1738 = vst.msk [vmem:[%s8 + $0xf0] sm:$0xff] %vm1707, %v1704
  %1739 = vst.msk [vmem:[%s8 + $0xf8] sm:$0xff] %vm1707, %v1706
  // Predicated region
  $region34: #{tpu_custom_call.1} parent=0 // pred_check
    _
  $region35: #{tpu_custom_call.1} parent=0 // pred_check_branch
    %1741 = sbr.rel (0) target = $region37
  $region36: #{tpu_custom_call.1} parent=0 // pred_region
    _
  $region37: #{tpu_custom_call.1} parent=0 // pred_fallthru
    _
  // Predicated region
  $region38: #{tpu_custom_call.1} parent=0 // pred_check
    _
  $region39: #{tpu_custom_call.1} parent=0 // pred_check_branch
    %1743 = sbr.rel (0) target = $region41
  $region40: #{tpu_custom_call.1} parent=0 // pred_region
    _
  $region41: #{tpu_custom_call.1} parent=0 // pred_fallthru
    _

</llo_original>
